<compile_context>
chip_gen: v5e
topology: v5e:2x2
jax: 0.10.0
libtpu: 0.0.40
codegen_flags: <defaults>
</compile_context>

<pallas_src>
import functools

import jax
import jax.numpy as jnp
from jax.experimental import pallas as pl
from jax.experimental.pallas import tpu as pltpu


# ----------------------------------------------------------------------------
# per-generation budget + tiling helpers
# ----------------------------------------------------------------------------
def _round_up(x, m):
    return (x + m - 1) // m * m


def _vmem_budget():
    """(vmem_limit_bytes, max row tile): generous on 128 MiB parts, tight on v7x."""
    cap = 64 * 1024 * 1024
    try:
        info = pltpu.get_tpu_info()
        cap = int(getattr(info, "vmem_capacity_bytes", cap))
    except Exception:
        pass
    if cap >= 128 * 1024 * 1024:          # v5e / v6e
        return 96 * 1024 * 1024, 1024
    return 32 * 1024 * 1024, 512          # v7x (64 MiB per TC) or unknown


_VMEM_LIMIT, _TM_CAP = _vmem_budget()


def _m_tiling(m):
    """Return (padded M, row tile). Row tile is a multiple of 8."""
    for c in (1024, 512, 256, 128):
        if c <= _TM_CAP and m % c == 0:
            return m, c
    if m <= _TM_CAP:
        mp = _round_up(m, 8)
        return mp, mp
    mp = _round_up(m, 256)
    return mp, 256


def _k_tile(k):
    # All Ks in ResNet-50 are <= 2048: use full K (weight-streaming 1x1 convs prefer
    # the fewest, largest blocks).
    if k <= 2048:
        return k
    for c in (2048, 1024, 512, 256):
        if k % c == 0:
            return c
    return k


def _n_tile(cout):
    for c in (512, 256, 128):
        if cout % c == 0:
            return c
    return cout


def _split_for_two_cores(m_pad, tm, cout, tn):
    """Ensure >=2 parallel tiles per call (v7x has 2 TensorCores); ~free elsewhere."""
    if (m_pad // tm) * (cout // tn) > 1:
        return tm
    half = tm // 2
    if half >= 8 and half % 8 == 0 and m_pad % half == 0:
        return half
    return tm


# ----------------------------------------------------------------------------
# tiled matmul kernel (1x1 convs, stem im2col): bias / residual / ReLU fused
# ----------------------------------------------------------------------------
def _mm_kernel(*refs, relu, has_res):
    if has_res:
        x_ref, w_ref, b_ref, r_ref, o_ref, acc_ref = refs
    else:
        x_ref, w_ref, b_ref, o_ref, acc_ref = refs
        r_ref = None
    k = pl.program_id(2)

    @pl.when(k == 0)
    def _():
        acc_ref[...] = jnp.zeros_like(acc_ref)

    acc_ref[...] += jnp.dot(x_ref[...], w_ref[...],
                            preferred_element_type=jnp.float32)

    @pl.when(k == pl.num_programs(2) - 1)
    def _():
        out = acc_ref[...] + b_ref[...]
        if r_ref is not None:
            out = out + r_ref[...].astype(jnp.float32)
        if relu:
            out = jnp.maximum(out, 0.0)
        o_ref[...] = out.astype(o_ref.dtype)


def matmul_bias(x, w, bias, relu, residual=None, out_dtype=jnp.bfloat16):
    """x (M,K) bf16 @ w (K,Cout) bf16 + bias (f32) [+ residual] [+ ReLU]."""
    M, K = x.shape
    Cout = w.shape[1]
    M_pad, tm = _m_tiling(M)
    tk = _k_tile(K)
    tn = _n_tile(Cout)
    tm = _split_for_two_cores(M_pad, tm, Cout, tn)
    if M_pad != M:
        x = jnp.pad(x, ((0, M_pad - M), (0, 0)))
        if residual is not None:
            residual = jnp.pad(residual, ((0, M_pad - M), (0, 0)))
    bias2 = bias.reshape(1, Cout)

    in_specs = [
        pl.BlockSpec((tm, tk), lambda i, j, k: (i, k)),
        pl.BlockSpec((tk, tn), lambda i, j, k: (k, j)),
        pl.BlockSpec((1, tn), lambda i, j, k: (0, j)),
    ]
    args = [x, w, bias2]
    if residual is not None:
        in_specs.append(pl.BlockSpec((tm, tn), lambda i, j, k: (i, j)))
        args.append(residual)

    out = pl.pallas_call(
        functools.partial(_mm_kernel, relu=relu, has_res=residual is not None),
        out_shape=jax.ShapeDtypeStruct((M_pad, Cout), out_dtype),
        grid_spec=pltpu.PrefetchScalarGridSpec(
            num_scalar_prefetch=0,
            grid=(M_pad // tm, Cout // tn, K // tk),
            in_specs=in_specs,
            out_specs=pl.BlockSpec((tm, tn), lambda i, j, k: (i, j)),
            scratch_shapes=[pltpu.VMEM((tm, tn), jnp.float32)],
        ),
        compiler_params=pltpu.CompilerParams(
            dimension_semantics=("parallel", "parallel", "arbitrary"),
            vmem_limit_bytes=_VMEM_LIMIT,
        ),
    )(*args)
    return out[:M] if M_pad != M else out


# ----------------------------------------------------------------------------
# implicit-im2col conv kernel: ONE union-slab DMA per M tile, taps are VMEM views
# ----------------------------------------------------------------------------
def _tap_conv_kernel(x_hbm, w_ref, b_ref, o_ref, slab, acc_ref, sem,
                     *, tm, slab_rows, groups, relu):
    """Union-slab implicit conv tile.

    x_hbm: flat zero-padded activation (rows, Cw) in HBM (pl.ANY).  For M tile i a
    single slab of `slab_rows` rows starting at row i*tm is DMAed into a double
    buffered VMEM scratch (prefetched one M tile ahead); each tap group is then a
    static in-VMEM view of that slab:
        acc += slab[off : off+tm, cs : cs+csz] @ w[k0 : k0+csz, :]
    groups: tuple of (row_offset, chan_start, chan_size, packed_k_start), python ints.
    """
    i = pl.program_id(1)
    ni = pl.num_programs(1)
    slot = i % 2

    def slab_copy(tile_idx, s):
        return pltpu.make_async_copy(
            x_hbm.at[pl.ds(tile_idx * tm, slab_rows), :],
            slab.at[s], sem.at[s])

    # Prime at the start of every M sweep (the M axis is "arbitrary" => strictly
    # sequential, so steps i>0 find their slab already in flight from step i-1).
    @pl.when(i == 0)
    def _():
        slab_copy(0, 0).start()

    slab_copy(i, slot).wait()

    # Cross-tile prefetch: fetch the next M tile's slab while computing this one.
    @pl.when(i + 1 < ni)
    def _():
        slab_copy(i + 1, 1 - slot).start()

    for g, (off, cs, csz, k0) in enumerate(groups):
        xg = slab[slot, pl.ds(off, tm), pl.ds(cs, csz)]
        wg = w_ref[pl.ds(k0, csz), :]
        part = jnp.dot(xg, wg, preferred_element_type=jnp.float32)
        if g == 0:
            acc_ref[...] = part
        else:
            acc_ref[...] += part

    out = acc_ref[...] + b_ref[...]
    if relu:
        out = jnp.maximum(out, 0.0)
    o_ref[...] = out.astype(o_ref.dtype)


def _tap_conv(xflat, w, bias, groups, slab_rows, M_pad, tm, tn, relu):
    Cw = xflat.shape[1]
    Ktot, Cout = w.shape
    return pl.pallas_call(
        functools.partial(_tap_conv_kernel, tm=tm, slab_rows=slab_rows,
                          groups=groups, relu=relu),
        out_shape=jax.ShapeDtypeStruct((M_pad, Cout), jnp.bfloat16),
        grid_spec=pltpu.PrefetchScalarGridSpec(
            num_scalar_prefetch=0,
            grid=(Cout // tn, M_pad // tm),       # M axis innermost: weights stay resident
            in_specs=[
                pl.BlockSpec(memory_space=pl.ANY),
                pl.BlockSpec((Ktot, tn), lambda j, i: (0, j)),
                pl.BlockSpec((1, tn), lambda j, i: (0, j)),
            ],
            out_specs=pl.BlockSpec((tm, tn), lambda j, i: (i, j)),
            scratch_shapes=[
                pltpu.VMEM((2, slab_rows, Cw), jnp.bfloat16),   # double-buffered slab
                pltpu.VMEM((tm, tn), jnp.float32),              # accumulator
                pltpu.SemaphoreType.DMA((2,)),
            ],
        ),
        compiler_params=pltpu.CompilerParams(
            # M axis must stay sequential: the slab DMA is prefetched across M steps.
            dimension_semantics=("parallel", "arbitrary"),
            vmem_limit_bytes=_VMEM_LIMIT,
        ),
    )(xflat, w, bias.reshape(1, Cout))


def conv3x3_s1(x, p, relu=True):
    """3x3 / stride 1 / pad 1 conv + folded BN (+ReLU), implicit im2col.

    On the padded spatial grid flattened row-major, tap (di, dj) is the constant
    flat-row offset di*Wp + dj; all 9 taps are views of one union slab per M tile.
    Border rows compute garbage and are sliced away afterwards.
    """
    N, H, W, Cin = x.shape
    w, bias = p["w"], p["b"]                     # (9*Cin, Cout) bf16, (Cout,) f32
    Cout = w.shape[1]
    Hp, Wp = H + 2, W + 2
    xp = jnp.pad(x, ((0, 0), (1, 1), (1, 1), (0, 0)))
    M = N * Hp * Wp
    M_pad, tm = _m_tiling(M)
    tn = _n_tile(Cout)
    max_off = 2 * Wp + 2
    slab_rows = _round_up(tm + max_off, 8)
    total = _round_up(M_pad + slab_rows, 8)
    xflat = jnp.pad(xp.reshape(M, Cin), ((0, total - M), (0, 0)))
    groups = tuple((di * Wp + dj, 0, Cin, (di * 3 + dj) * Cin)
                   for di in range(3) for dj in range(3))
    out = _tap_conv(xflat, w, bias, groups, slab_rows, M_pad, tm, tn, relu)
    out = out[:M].reshape(N, Hp, Wp, Cout)
    return out[:, :H, :W, :]


# Phase order used both for the activation channel-concat and the weight packing.
_PHASES = ((0, 1), (0, 0), (1, 0), (1, 1))


def conv3x3_s2(x, p, relu=True):
    """3x3 / stride 2 / pad 1 conv + folded BN (+ReLU) without explicit im2col.

    The padded input is split into its 4 even/odd sampling phases and channel
    concatenated; under that layout every tap becomes a constant flat-row offset of
    the phase grid, so the union-slab kernel is reused with 4 tap groups (each a
    contiguous channel slice -> total K = 9*Cin, no wasted MXU work).
    """
    N, H, W, Cin = x.shape
    assert H % 2 == 0 and W % 2 == 0
    w, bias = p["w"], p["b"]                     # (9*Cin, Cout) phase-grouped packing
    Cout = w.shape[1]
    xp = jnp.pad(x, ((0, 0), (1, 1), (1, 1), (0, 0)))
    Hph, Wph = H // 2 + 1, W // 2 + 1
    Ho, Wo = H // 2, W // 2
    xcat = jnp.concatenate([xp[:, a::2, b::2, :] for a, b in _PHASES], axis=-1)
    Cw = 4 * Cin
    M = N * Hph * Wph
    M_pad, tm = _m_tiling(M)
    tn = _n_tile(Cout)
    max_off = Wph + 1
    slab_rows = _round_up(tm + max_off, 8)
    total = _round_up(M_pad + slab_rows, 8)
    xflat = jnp.pad(xcat.reshape(M, Cw), ((0, total - M), (0, 0)))
    groups = (
        (0, 0, 4 * Cin, 0),            # taps (0,0)(0,1)(1,0)(1,1): all four phases
        (1, Cin, 2 * Cin, 4 * Cin),    # taps (0,2)(1,2): phases (0,0),(1,0)
        (Wph, 0, 2 * Cin, 6 * Cin),    # taps (2,0)(2,1): phases (0,1),(0,0)
        (Wph + 1, Cin, Cin, 8 * Cin),  # tap  (2,2): phase (0,0)
    )
    out = _tap_conv(xflat, w, bias, groups, slab_rows, M_pad, tm, tn, relu)
    out = out[:M].reshape(N, Hph, Wph, Cout)
    return out[:, :Ho, :Wo, :]


# ----------------------------------------------------------------------------
# maxpool / global average pool
# ----------------------------------------------------------------------------
def _maxpool_kernel(x_ref, o_ref):
    # x_ref: (1, Hp, Wo+1, 2C) padded input with column pairs packed on the lane axis.
    _, Ho, Wo, C = o_ref.shape
    x = x_ref[0]
    xr = x.reshape(Ho + 1, 2, Wo + 1, 2 * C)
    rows = jnp.maximum(jnp.maximum(xr[:Ho, 0], xr[:Ho, 1]), xr[1:, 0])
    even, odd = rows[..., :C], rows[..., C:]
    o_ref[0] = jnp.maximum(jnp.maximum(even[:, :Wo, :], odd[:, :Wo, :]),
                           even[:, 1:, :])


def maxpool_3x3_s2(x):
    """3x3 max pool, stride 2, pad 1 -- reduced in-kernel from one padded block/image."""
    N, H, W, C = x.shape
    Ho, Wo = H // 2, W // 2
    neg = jnp.finfo(x.dtype).min
    xp = jnp.pad(x, ((0, 0), (1, 1), (1, 1), (0, 0)), constant_values=neg)
    xp = xp.reshape(N, H + 2, Wo + 1, 2 * C)
    return pl.pallas_call(
        _maxpool_kernel,
        out_shape=jax.ShapeDtypeStruct((N, Ho, Wo, C), x.dtype),
        grid=(N,),
        in_specs=[pl.BlockSpec((1, H + 2, Wo + 1, 2 * C), lambda i: (i, 0, 0, 0))],
        out_specs=pl.BlockSpec((1, Ho, Wo, C), lambda i: (i, 0, 0, 0)),
        compiler_params=pltpu.CompilerParams(dimension_semantics=("parallel",)),
    )(xp)


def _gap_kernel(x_ref, o_ref):
    o_ref[0] = jnp.mean(x_ref[0].astype(jnp.float32), axis=0, keepdims=True)


def global_avg_pool(x):
    N, H, W, C = x.shape
    xr = x.reshape(N, H * W, C)
    out = pl.pallas_call(
        _gap_kernel,
        out_shape=jax.ShapeDtypeStruct((N, 1, C), jnp.float32),
        grid=(N,),
        in_specs=[pl.BlockSpec((1, H * W, C), lambda i: (i, 0, 0))],
        out_specs=pl.BlockSpec((1, 1, C), lambda i: (i, 0, 0)),
        compiler_params=pltpu.CompilerParams(dimension_semantics=("parallel",)),
    )(xr)
    return out.reshape(N, C)


# ----------------------------------------------------------------------------
# conv wrappers (JAX glue; explicit im2col only for the 7x7 stem)
# ----------------------------------------------------------------------------
def conv1x1(x, p, stride=1, relu=True, residual=None):
    if stride > 1:
        x = x[:, ::stride, ::stride, :]
    N, H, W, Cin = x.shape
    Cout = p["w"].shape[1]
    xf = x.reshape(N * H * W, Cin)
    rf = residual.reshape(N * H * W, Cout) if residual is not None else None
    out = matmul_bias(xf, p["w"], p["b"], relu, rf)
    return out.reshape(N, H, W, Cout)


def im2col(x, kh, kw, stride, pad):
    # TODO(synk): only used for the 7x7/s2 stem; stride-2 7x7 taps are not constant
    # flat-row offsets of a single grid, so the stem still materializes patches.
    N, H, W, C = x.shape
    xp = jnp.pad(x, ((0, 0), (pad, pad), (pad, pad), (0, 0)))
    Ho = (H + 2 * pad - kh) // stride + 1
    Wo = (W + 2 * pad - kw) // stride + 1
    cols = []
    for i in range(kh):
        for j in range(kw):
            cols.append(xp[:, i:i + stride * (Ho - 1) + 1:stride,
                           j:j + stride * (Wo - 1) + 1:stride, :])
    patches = jnp.concatenate(cols, axis=-1)
    return patches.reshape(N * Ho * Wo, kh * kw * C), Ho, Wo


def conv_im2col(x, p, stride, relu):
    kh, kw = p["ksize"]
    K_pad, Cout = p["w"].shape
    N = x.shape[0]
    patches, Ho, Wo = im2col(x, kh, kw, stride, kh // 2)
    K = patches.shape[1]
    if K_pad != K:                               # stem K = 147 zero-padded to 256
        patches = jnp.pad(patches, ((0, 0), (0, K_pad - K)))
    out = matmul_bias(patches, p["w"], p["b"], relu)
    return out.reshape(N, Ho, Wo, Cout)


# ----------------------------------------------------------------------------
# Deterministic parameter construction (synthetic ResNet-50, BN folded, bf16 weights)
# ----------------------------------------------------------------------------
def make_conv_bn_params(key, kh, kw, cin, cout, layout):
    kkey, gkey, bkey = jax.random.split(key, 3)
    fan_in = kh * kw * cin
    w = jax.random.normal(kkey, (kh, kw, cin, cout), jnp.float32) * jnp.sqrt(2.0 / fan_in)
    gamma = 1.0 + 0.1 * jax.random.normal(gkey, (cout,), jnp.float32)
    beta = 0.1 * jax.random.normal(bkey, (cout,), jnp.float32)
    running_mean = jnp.zeros((cout,), jnp.float32)
    running_var = jnp.ones((cout,), jnp.float32)
    eps = 1e-5
    scale = gamma / jnp.sqrt(running_var + eps)
    bias = beta - running_mean * scale
    wf = (w * scale).astype(jnp.bfloat16)        # fold BN scale into the conv weights
    if layout == "1x1":
        wk = wf.reshape(cin, cout)
    elif layout == "taps":                       # 3x3 stride-1: flat (9*Cin, Cout), tap-major
        wk = wf.reshape(kh * kw * cin, cout)
    elif layout == "s2taps":                     # 3x3 stride-2: phase-grouped packing
        order = [(0, 1), (0, 0), (1, 0), (1, 1),     # row offset 0       (all 4 phases)
                 (0, 2), (1, 2),                     # row offset 1       (phases 00,10)
                 (2, 1), (2, 0),                     # row offset Wph     (phases 01,00)
                 (2, 2)]                             # row offset Wph+1   (phase  00)
        wk = jnp.concatenate([wf[di, dj] for di, dj in order], axis=0)
    else:                                        # explicit im2col: (K, Cout), K padded
        K = kh * kw * cin
        wk = wf.reshape(K, cout)
        K_pad = _round_up(K, 128)                # lane-dense K (stem: 147 -> 256)
        if K_pad != K:
            wk = jnp.pad(wk, ((0, K_pad - K), (0, 0)))
    return {"w": wk, "b": bias, "ksize": (kh, kw)}


def build_resnet50_params(key):
    keys = iter(jax.random.split(key, 256))
    params = {"stem": make_conv_bn_params(next(keys), 7, 7, 3, 64, "im2col")}
    layers = []
    in_ch = 64
    cfg = [(64, 3, 1), (128, 4, 2), (256, 6, 2), (512, 3, 2)]   # ResNet-50: 3,4,6,3
    for planes, n_blocks, stride in cfg:
        blocks = []
        for b in range(n_blocks):
            s = stride if b == 0 else 1
            out_ch = planes * 4
            blk = {
                "conv1": make_conv_bn_params(next(keys), 1, 1, in_ch, planes, "1x1"),
                "conv2": make_conv_bn_params(next(keys), 3, 3, planes, planes,
                                             "taps" if s == 1 else "s2taps"),
                "conv3": make_conv_bn_params(next(keys), 1, 1, planes, out_ch, "1x1"),
                "stride": s,
            }
            if s != 1 or in_ch != out_ch:
                blk["downsample"] = make_conv_bn_params(
                    next(keys), 1, 1, in_ch, out_ch, "1x1")
            blocks.append(blk)
            in_ch = out_ch
        layers.append(blocks)
    params["layers"] = layers
    return params


# ----------------------------------------------------------------------------
# Forward pass (equivalent to timm resnet50(num_classes=0): pooled features)
# ----------------------------------------------------------------------------
def resnet50_features(x_nchw, params):
    x = jnp.transpose(x_nchw, (0, 2, 3, 1)).astype(jnp.bfloat16)   # NCHW -> NHWC, bf16
    # Stem: 7x7/s2 conv + BN + ReLU, then 3x3/s2 maxpool.
    x = conv_im2col(x, params["stem"], stride=2, relu=True)
    x = maxpool_3x3_s2(x)
    # Four bottleneck stages.
    for blocks in params["layers"]:
        for blk in blocks:
            s = blk["stride"]
            out = conv1x1(x, blk["conv1"], relu=True)
            if s == 1:
                out = conv3x3_s1(out, blk["conv2"], relu=True)
            else:
                out = conv3x3_s2(out, blk["conv2"], relu=True)
            identity = (conv1x1(x, blk["downsample"], stride=s, relu=False)
                        if "downsample" in blk else x)
            # conv3: 1x1 conv + BN with the residual add + ReLU fused into its epilogue.
            x = conv1x1(out, blk["conv3"], relu=True, residual=identity)
    # Global average pool -> (N, 2048) f32 features (num_classes=0: no fc head).
    return global_avg_pool(x)


if __name__ == "__main__":
    key = jax.random.PRNGKey(0)
    pkey, xkey = jax.random.split(key)
    params = build_resnet50_params(pkey)
    # Small input, NCHW like the PyTorch module (3 channels required by the ResNet stem).
    x = jax.random.normal(xkey, (2, 3, 64, 64), jnp.float32)
    feats = resnet50_features(x, params)
    feats = jax.block_until_ready(feats)
    assert feats.shape == (2, 2048) and feats.dtype == jnp.float32
    print("KERNEL_OK")
</pallas_src>

<mosaic_0001>
module attributes {stable_mosaic.version = 11 : i64} {
  func.func @_mm_kernel(%arg0: i32, %arg1: i32, %arg2: i32, %arg3: memref<512x256xbf16, #tpu.memory_space<vmem>>, %arg4: memref<256x64xbf16, #tpu.memory_space<vmem>>, %arg5: memref<1x64xf32, #tpu.memory_space<vmem>>, %arg6: memref<512x64xbf16, #tpu.memory_space<vmem>>, %arg7: memref<512x64xf32, #tpu.memory_space<vmem>>) attributes {dimension_semantics = [#tpu.dimension_semantics<parallel>, #tpu.dimension_semantics<parallel>, #tpu.dimension_semantics<arbitrary>], iteration_bounds = array<i64: 4, 1, 1>, scalar_prefetch = 0 : i64, scratch_operands = 1 : i64, tpu.core_type = #tpu.core_type<tc>, window_params = [{transform_indices = @transform_0, window_bounds = array<i64: 512, 256>}, {transform_indices = @transform_1, window_bounds = array<i64: 256, 64>}, {transform_indices = @transform_2, window_bounds = array<i64: 1, 64>}, {transform_indices = @transform_3, window_bounds = array<i64: 512, 64>}]} {
    %c0_i32 = arith.constant 0 : i32
    %0 = arith.cmpi eq, %arg2, %c0_i32 : i32
    %1 = arith.extui %0 : i1 to i32
    %c0_i32_0 = arith.constant 0 : i32
    %2 = arith.cmpi ne, %1, %c0_i32_0 : i32
    scf.if %2 {
      %cst_10 = arith.constant 0.000000e+00 : f32
      %12 = vector.broadcast %cst_10 : f32 to vector<512x64xf32>
      %c0_11 = arith.constant 0 : index
      %c0_12 = arith.constant 0 : index
      %13 = vector.load %arg7[%c0_11, %c0_12] : memref<512x64xf32, #tpu.memory_space<vmem>>, vector<512x64xf32>
      tpu.vector_store %arg7[%c0_11, %c0_12], %12 {strides = array<i32>} : memref<512x64xf32, #tpu.memory_space<vmem>>, vector<512x64xf32>,
    } else {
    }
    %c0 = arith.constant 0 : index
    %c0_1 = arith.constant 0 : index
    %3 = vector.load %arg7[%c0, %c0_1] : memref<512x64xf32, #tpu.memory_space<vmem>>, vector<512x64xf32>
    %c0_2 = arith.constant 0 : index
    %c0_3 = arith.constant 0 : index
    %4 = vector.load %arg3[%c0_2, %c0_3] : memref<512x256xbf16, #tpu.memory_space<vmem>>, vector<512x256xbf16>
    %c0_4 = arith.constant 0 : index
    %c0_5 = arith.constant 0 : index
    %5 = vector.load %arg4[%c0_4, %c0_5] : memref<256x64xbf16, #tpu.memory_space<vmem>>, vector<256x64xbf16>
    %cst = arith.constant dense<0.000000e+00> : vector<512x64xf32>
    %6 = tpu.matmul %4, %5, %cst {dimension_numbers = #tpu.dot_dimension_numbers<[1], [0], [0], [1], [0, 0, 1, 1], [], []>} : vector<512x256xbf16>, vector<256x64xbf16>, vector<512x64xf32> -> vector<512x64xf32>
    %7 = arith.addf %3, %6 : vector<512x64xf32>
    %c0_6 = arith.constant 0 : index
    %c0_7 = arith.constant 0 : index
    %8 = vector.load %arg7[%c0_6, %c0_7] : memref<512x64xf32, #tpu.memory_space<vmem>>, vector<512x64xf32>
    tpu.vector_store %arg7[%c0_6, %c0_7], %7 {strides = array<i32>} : memref<512x64xf32, #tpu.memory_space<vmem>>, vector<512x64xf32>,
    %c0_i32_8 = arith.constant 0 : i32
    %9 = arith.cmpi eq, %arg2, %c0_i32_8 : i32
    %10 = arith.extui %9 : i1 to i32
    %c0_i32_9 = arith.constant 0 : i32
    %11 = arith.cmpi ne, %10, %c0_i32_9 : i32
    scf.if %11 {
      %c0_10 = arith.constant 0 : index
      %c0_11 = arith.constant 0 : index
      %12 = vector.load %arg7[%c0_10, %c0_11] : memref<512x64xf32, #tpu.memory_space<vmem>>, vector<512x64xf32>
      %c0_12 = arith.constant 0 : index
      %c0_13 = arith.constant 0 : index
      %13 = vector.load %arg5[%c0_12, %c0_13] : memref<1x64xf32, #tpu.memory_space<vmem>>, vector<1x64xf32>
      %14 = vector.broadcast %13 : vector<1x64xf32> to vector<512x64xf32>
      %15 = arith.addf %12, %14 : vector<512x64xf32>
      %cst_14 = arith.constant 0.000000e+00 : f32
      %16 = vector.broadcast %cst_14 : f32 to vector<512x64xf32>
      %17 = arith.maximumf %15, %16 : vector<512x64xf32>
      %18 = arith.truncf %17 : vector<512x64xf32> to vector<512x64xbf16>
      %c0_15 = arith.constant 0 : index
      %c0_16 = arith.constant 0 : index
      %19 = vector.load %arg6[%c0_15, %c0_16] : memref<512x64xbf16, #tpu.memory_space<vmem>>, vector<512x64xbf16>
      tpu.vector_store %arg6[%c0_15, %c0_16], %18 {strides = array<i32>} : memref<512x64xbf16, #tpu.memory_space<vmem>>, vector<512x64xbf16>,
    } else {
    }
    return
  }
  func.func @transform_0(%arg0: i32, %arg1: i32, %arg2: i32) -> (i32, i32) {
    %c0_i32 = arith.constant 0 : i32
    return %arg0, %arg2 : i32, i32
  }
  func.func @transform_1(%arg0: i32, %arg1: i32, %arg2: i32) -> (i32, i32) {
    %c0_i32 = arith.constant 0 : i32
    return %arg2, %arg1 : i32, i32
  }
  func.func @transform_2(%arg0: i32, %arg1: i32, %arg2: i32) -> (i32, i32) {
    %c0_i32 = arith.constant 0 : i32
    %c0_i32_0 = arith.constant 0 : i32
    return %c0_i32, %arg1 : i32, i32
  }
  func.func @transform_3(%arg0: i32, %arg1: i32, %arg2: i32) -> (i32, i32) {
    %c0_i32 = arith.constant 0 : i32
    return %arg0, %arg1 : i32, i32
  }
}

</mosaic_0001>

<llo_original>
// kernel: tpu_custom_call.1
$region0: #{tpu_custom_call.1}
  #allocation0 [shape = 'u32[]', space=smem, size = 0x4, offset = 0x4, fixed_abs, tag = 'smem constant byte address 0x4 - core index']
  #allocation1 [shape = 'u32[72,128]{1,0:T(1,128)}', space=vmem, size = 0x9000, scoped, tag = 'internal scratch']
  #allocation2 [shape = 'f32[512,64]{1,0:T(8,128)}', space=vmem, size = 0x40000, scoped, tag = 'scratch operand']
  %s0 = inlined_call_operand.hbm [shape: bf16[2048,256], index: 0, kind: input, shape index: {}]
  %s1 = inlined_call_operand.vmem [shape: bf16[256,64], index: 1, kind: input, shape index: {}]
  %s2 = inlined_call_operand.vmem [shape: f32[1,64], index: 2, kind: input, shape index: {}]
  %s3 = inlined_call_operand.vmem [shape: bf16[2048,64], index: 3, kind: output, shape index: {}]
  %s4 = sld [smem:[#allocation0]]
  $region57: #{tpu_custom_call.1} parent=0
    _
  %s6 = ssub.s32 1, %s4
  %s7 = scalar_select 0, %s6, %s4
  $region1: #{tpu_custom_call.1} parent=0
    #allocation3 [shape = 'u8[524288]{0}', space=vmem, size = 0x80000, scoped, tag = 'input window, operand 0']
    #allocation4 [shape = 's32[2]{0}', space=sflag, size = 0x8, scoped, tag = 'scoped memory for tpu_custom_call.1']
    %8 = vsyncpa [#allocation4], 0
    %s9 = scalar_lea.sflag [#allocation4], 1
    %10 = vsyncpa %s9, 0
    loop: start=0, step=1, limit=6
    $region2: #{tpu_custom_call.1} parent=1 // loop_pre_header
      _
    $region3: #{tpu_custom_call.1} parent=1 // loop_header
      %s12 = sphi 0, %s16
      %p13 = scmp.ge.s32.totalorder %s12, 6
      %s19 = sphi 0, %s38
      %s20 = sphi 0, %s34
      %s21 = sphi 0, %s30
      %s22 = sphi 0, %s19
      %s23 = sphi 0, %s20
      %s24 = sphi 0, %s21
      %s25 = sphi 0, %s22
      %s26 = sphi 0, %s23
      %s27 = sphi 0, %s24
      %s43 = sphi 0, %s45
      %s46 = sphi 0, %s43
      %s47 = sphi 0, %s46
      %s63 = sphi 0, %s47
      %s71 = sphi 0, %s73
      %s74 = sphi 0, %s71
      %s75 = sphi 0, %s74
      %s91 = sphi 0, %s75
      %s97 = sphi 0, %s99
      %s100 = sphi 0, %s97
      %s101 = sphi 0, %s100
      %s117 = sphi 0, %s101
      %s125 = sphi 0, %s127
      %s128 = sphi 0, %s125
      %s129 = sphi 0, %s128
      %s145 = sphi 0, %s129
    $region4: #{tpu_custom_call.1} parent=1 // loop_header_branch
      %15 = sbr.rel (%p13) target = $region8
    $region5: #{tpu_custom_call.1} parent=1 // loop_body
      %s17 = ssub.s32 %s12, 1
      %s18 = ssub.s32 %s12, 2
      %s28 = sadd.s32 1, %s21
      %p29 = scmp.ge.s32.totalorder %s28, 1
      %s30 = scalar_select %p29, 0, %s28
      %s31 = sadd.s32 1, %s20
      %s32 = scalar_select %p29, %s31, %s20
      %p33 = scmp.ge.s32.totalorder %s32, 1
      %s34 = scalar_select %p33, 0, %s32
      %s35 = sadd.s32 1, %s19
      %s36 = scalar_select %p33, %s35, %s19
      %p37 = scmp.ge.s32.totalorder %s36, 4
      %s38 = scalar_select %p37, 0, %s36
      %s39 = ssub.s32 %s19, %s38
      %s40 = ssub.s32 %s21, %s30
      %s41 = sor.u32 %s39, %s40
      %p42 = scmp.eq.s32.totalorder %s41, 0
      %s44 = sadd.s32 %s43, 1
      %s45 = scalar_select %p42, %s43, %s44
      %p48 = pneg %p42
      %p49 = scmp.eq.s32.totalorder %s12, 3
      %p50 = por %p48, %p49
      %p51 = scmp.ne.s32.totalorder %s43, %s46
      %p52 = scmp.eq.s32.totalorder %s12, 0
      %p53 = por %p51, %p52
      %p54 = scmp.ne.s32.totalorder %s43, %s46
      %p55 = scmp.eq.s32.totalorder %s17, 3
      %p56 = por %p54, %p55
      %p57 = scmp.ne.s32.totalorder %s46, %s47
      %p58 = scmp.eq.s32.totalorder %s17, 0
      %p59 = por %p57, %p58
      %p60 = scmp.ne.s32.totalorder %s46, %s47
      %p61 = scmp.eq.s32.totalorder %s18, 3
      %p62 = por %p60, %p61
      %p64 = scmp.ne.s32.totalorder %s47, %s63
      %p65 = scmp.eq.s32.totalorder %s18, 0
      %p66 = por %p64, %p65
      %s67 = ssub.s32 %s21, %s30
      %s68 = ssub.s32 %s20, %s34
      %s69 = sor.u32 %s67, %s68
      %p70 = scmp.eq.s32.totalorder %s69, 0
      %s72 = sadd.s32 %s71, 1
      %s73 = scalar_select %p70, %s71, %s72
      %p76 = pneg %p70
      %p77 = scmp.eq.s32.totalorder %s12, 3
      %p78 = por %p76, %p77
      %p79 = scmp.ne.s32.totalorder %s71, %s74
      %p80 = scmp.eq.s32.totalorder %s12, 0
      %p81 = por %p79, %p80
      %p82 = scmp.ne.s32.totalorder %s71, %s74
      %p83 = scmp.eq.s32.totalorder %s17, 3
      %p84 = por %p82, %p83
      %p85 = scmp.ne.s32.totalorder %s74, %s75
      %p86 = scmp.eq.s32.totalorder %s17, 0
      %p87 = por %p85, %p86
      %p88 = scmp.ne.s32.totalorder %s74, %s75
      %p89 = scmp.eq.s32.totalorder %s18, 3
      %p90 = por %p88, %p89
      %p92 = scmp.ne.s32.totalorder %s75, %s91
      %p93 = scmp.eq.s32.totalorder %s18, 0
      %p94 = por %p92, %p93
      %s95 = ssub.s32 %s20, %s34
      %p96 = scmp.eq.s32.totalorder %s95, 0
      %s98 = sadd.s32 %s97, 1
      %s99 = scalar_select %p96, %s97, %s98
      %p102 = pneg %p96
      %p103 = scmp.eq.s32.totalorder %s12, 3
      %p104 = por %p102, %p103
      %p105 = scmp.ne.s32.totalorder %s97, %s100
      %p106 = scmp.eq.s32.totalorder %s12, 0
      %p107 = por %p105, %p106
      %p108 = scmp.ne.s32.totalorder %s97, %s100
      %p109 = scmp.eq.s32.totalorder %s17, 3
      %p110 = por %p108, %p109
      %p111 = scmp.ne.s32.totalorder %s100, %s101
      %p112 = scmp.eq.s32.totalorder %s17, 0
      %p113 = por %p111, %p112
      %p114 = scmp.ne.s32.totalorder %s100, %s101
      %p115 = scmp.eq.s32.totalorder %s18, 3
      %p116 = por %p114, %p115
      %p118 = scmp.ne.s32.totalorder %s101, %s117
      %p119 = scmp.eq.s32.totalorder %s18, 0
      %p120 = por %p118, %p119
      %s121 = ssub.s32 %s19, %s38
      %s122 = ssub.s32 %s20, %s34
      %s123 = sor.u32 %s121, %s122
      %p124 = scmp.eq.s32.totalorder %s123, 0
      %s126 = sadd.s32 %s125, 1
      %s127 = scalar_select %p124, %s125, %s126
      %p130 = pneg %p124
      %p131 = scmp.eq.s32.totalorder %s12, 3
      %p132 = por %p130, %p131
      %p133 = scmp.ne.s32.totalorder %s125, %s128
      %p134 = scmp.eq.s32.totalorder %s12, 0
      %p135 = por %p133, %p134
      %p136 = scmp.ne.s32.totalorder %s125, %s128
      %p137 = scmp.eq.s32.totalorder %s17, 3
      %p138 = por %p136, %p137
      %p139 = scmp.ne.s32.totalorder %s128, %s129
      %p140 = scmp.eq.s32.totalorder %s17, 0
      %p141 = por %p139, %p140
      %p142 = scmp.ne.s32.totalorder %s128, %s129
      %p143 = scmp.eq.s32.totalorder %s18, 3
      %p144 = por %p142, %p143
      %p146 = scmp.ne.s32.totalorder %s129, %s145
      %p147 = scmp.eq.s32.totalorder %s18, 0
      %p148 = por %p146, %p147
      %p149 = scmp.le.s32.totalorder 1, %s12
      %p150 = scmp.lt.s32.totalorder %s12, 5
      %p151 = pnand %p149, %p150
      %p152 = pneg %p151
      // Predicated region
      $region9: #{tpu_custom_call.1} parent=5 // pred_check
        _
      $region10: #{tpu_custom_call.1} parent=5 // pred_check_branch
        %154 = sbr.rel (%p151) target = $region12
      $region11: #{tpu_custom_call.1} parent=5 // pred_region
        %s155 = ssub.s32 %s12, 1
        // Predicated region
        $region13: #{tpu_custom_call.1} parent=11 // pred_check
          %p156 = pneg %p87
        $region14: #{tpu_custom_call.1} parent=11 // pred_check_branch
          %158 = sbr.rel (%p156) target = $region16
        $region15: #{tpu_custom_call.1} parent=11 // pred_region
          %s159 = smul.u32 32, %s24
          %p160 = scmp.lt.s32.totalorder %s159, 31
          %s161 = scalar_select %p160, %s159, 31
          %p162 = scmp.lt.s32.totalorder %s23, 0
          %s163 = scalar_select %p162, %s23, 0
          %s164 = sadd.s32 %s163, %s161
          %s165 = smul.addr %s164, 4
          %s166 = scalar_lea.vmem %s1, %s165
          %s167 = smul.u32 32, %s24
        $region16: #{tpu_custom_call.1} parent=11 // pred_fallthru
          _
        // Predicated region
        $region17: #{tpu_custom_call.1} parent=11 // pred_check
          %p168 = pneg %p113
        $region18: #{tpu_custom_call.1} parent=11 // pred_check_branch
          %170 = sbr.rel (%p168) target = $region20
        $region19: #{tpu_custom_call.1} parent=11 // pred_region
          %p171 = scmp.lt.s32.totalorder %s23, 0
          %s172 = scalar_select %p171, %s23, 0
          %s173 = scalar_lea.vmem %s2, %s172
        $region20: #{tpu_custom_call.1} parent=11 // pred_fallthru
          _
      $region12: #{tpu_custom_call.1} parent=5 // pred_fallthru
        _
      %p174 = scmp.lt.s32.totalorder %s12, 4
      // Predicated region
      $region21: #{tpu_custom_call.1} parent=5 // pred_check
        %p175 = pneg %p174
      $region22: #{tpu_custom_call.1} parent=5 // pred_check_branch
        %177 = sbr.rel (%p175) target = $region24
      $region23: #{tpu_custom_call.1} parent=5 // pred_region
        // Predicated region
        $region25: #{tpu_custom_call.1} parent=23 // pred_check
          %p178 = pneg %p53
        $region26: #{tpu_custom_call.1} parent=23 // pred_check_branch
          %180 = sbr.rel (%p178) target = $region28
        $region27: #{tpu_custom_call.1} parent=23 // pred_region
          %s181 = sand.u32 %s43, 1
          %s182 = scalar_lea.sflag [#allocation4], %s181
          %s183 = sand.u32 %s43, 1
          %s184 = smul.addr %s183, 512
          %s185 = scalar_lea.vmem [#allocation3], %s184
          %s186 = smul.u32 64, %s19
          %s187 = smul.u32 2, %s21
          %189 = vsyncadd %s182, 0
          %s190 = smul.addr %s186, 2
          %s191 = sadd.s32 %s187, %s190
          %s192 = smul.addr %s191, 4
          %s193 = scalar_lea.hbm %s0, %s192
          %s194 = sshll.u32 %s193, 4
          %s195 = int_to_ptr.hbm [resolvable:$true] %s194
          %s196 = sshll.u32 %s185, 4
          %s197 = int_to_ptr.vmem [resolvable:$true] %s196
          %202 = dma.hbm_to_vmem [thread:$0]  %s195, 8192, %s197, %s182, 128, 128, 8
        $region28: #{tpu_custom_call.1} parent=23 // pred_fallthru
          _
      $region24: #{tpu_custom_call.1} parent=5 // pred_fallthru
        _
      %p203 = scmp.le.s32.totalorder 1, %s12
      %p204 = scmp.lt.s32.totalorder %s12, 5
      %p205 = pnand %p203, %p204
      %p206 = pneg %p205
      // Predicated region
      $region29: #{tpu_custom_call.1} parent=5 // pred_check
        _
      $region30: #{tpu_custom_call.1} parent=5 // pred_check_branch
        %208 = sbr.rel (%p205) target = $region32
      $region31: #{tpu_custom_call.1} parent=5 // pred_region
        %s209 = ssub.s32 %s12, 1
        %s210 = sand.u32 %s46, 1
        %s211 = scalar_lea.sflag [#allocation4], %s210
        %s212 = sand.u32 %s46, 1
        %s213 = smul.addr %s212, 512
        %s214 = scalar_lea.vmem [#allocation3], %s213
        // Predicated region
        $region33: #{tpu_custom_call.1} parent=31 // pred_check
          %p215 = pneg %p59
        $region34: #{tpu_custom_call.1} parent=31 // pred_check_branch
          %217 = sbr.rel (%p215) target = $region36
        $region35: #{tpu_custom_call.1} parent=31 // pred_region
          %219 = dma.done %s211, 8192
        $region36: #{tpu_custom_call.1} parent=31 // pred_fallthru
          _
        %s220 = sand.u32 %s46, 1
        %s221 = scalar_lea.sflag [#allocation4], %s220
        %s222 = sand.u32 %s46, 1
        %s223 = smul.addr %s222, 512
        %s224 = scalar_lea.vmem [#allocation3], %s223
        %p225 = pneg %p59
        %p226 = pneg %p56
        %s227 = smul.u32 32, %s24
        %p228 = scmp.lt.s32.totalorder %s227, 31
        %s229 = scalar_select %p228, %s227, 31
        %p230 = scmp.lt.s32.totalorder %s23, 0
        %s231 = scalar_select %p230, %s23, 0
        %s232 = sadd.s32 %s231, %s229
        %s233 = smul.addr %s232, 4
        %s234 = scalar_lea.vmem %s1, %s233
        %p235 = pneg %p87
        %p236 = pneg %p84
        %p237 = scmp.lt.s32.totalorder %s23, 0
        %s238 = scalar_select %p237, %s23, 0
        %s239 = scalar_lea.vmem %s2, %s238
        %p240 = pneg %p113
        %p241 = pneg %p110
        %p242 = pneg %p141
        %p243 = pneg %p138
        %s244 = smul.u32 64, %s22
        %p245 = scmp.lt.s32.totalorder %s244, 255
        %s246 = scalar_select %p245, %s244, 255
        %p247 = scmp.lt.s32.totalorder %s23, 0
        %s248 = scalar_select %p247, %s23, 0
        %s249 = sadd.s32 %s248, %s246
        %s250 = smul.addr %s249, 4
        %s251 = scalar_lea.vmem %s3, %s250
        %s252 = smul.u32 64, %s22
        %s253 = smul.u32 2, %s24
        %s254 = smul.u32 32, %s24
        %p255 = scmp.lt.s32.totalorder %s254, 31
        %s256 = scalar_select %p255, %s254, 31
        %p257 = scmp.lt.s32.totalorder %s23, 0
        %s258 = scalar_select %p257, %s23, 0
        %s259 = sadd.s32 %s258, %s256
        %s260 = smul.addr %s259, 4
        %s261 = scalar_lea.vmem %s1, %s260
        %s262 = smul.u32 32, %s24
        %p263 = scmp.lt.s32.totalorder %s23, 0
        %s264 = scalar_select %p263, %s23, 0
        %s265 = scalar_lea.vmem %s2, %s264
        %s266 = smul.u32 64, %s22
        %p267 = scmp.lt.s32.totalorder %s266, 255
        %s268 = scalar_select %p267, %s266, 255
        %p269 = scmp.lt.s32.totalorder %s23, 0
        %s270 = scalar_select %p269, %s23, 0
        %s271 = sadd.s32 %s270, %s268
        %s272 = smul.addr %s271, 4
        %s273 = scalar_lea.vmem %s3, %s272
        %s274 = smul.u32 64, %s22
        %p275 = scmp.eq.s32.totalorder %s24, 0
        // Predicated region
        $region37: #{tpu_custom_call.1} parent=31 // pred_check
          %p276 = pneg %p275
        $region38: #{tpu_custom_call.1} parent=31 // pred_check_branch
          %278 = sbr.rel (%p276) target = $region40
        $region39: #{tpu_custom_call.1} parent=31 // pred_region
          %vm279 = vcmask 523264
          %280 = vst.msk [vmem:[#allocation2] sm:$0xff] %vm279, 0.0
          %281 = vst.msk [vmem:[#allocation2 + $0x8] sm:$0xff] %vm279, 0.0
          %282 = vst.msk [vmem:[#allocation2 + $0x10] sm:$0xff] %vm279, 0.0
          %283 = vst.msk [vmem:[#allocation2 + $0x18] sm:$0xff] %vm279, 0.0
          %284 = vst.msk [vmem:[#allocation2 + $0x20] sm:$0xff] %vm279, 0.0
          %285 = vst.msk [vmem:[#allocation2 + $0x28] sm:$0xff] %vm279, 0.0
          %286 = vst.msk [vmem:[#allocation2 + $0x30] sm:$0xff] %vm279, 0.0
          %287 = vst.msk [vmem:[#allocation2 + $0x38] sm:$0xff] %vm279, 0.0
          %288 = vst.msk [vmem:[#allocation2 + $0x40] sm:$0xff] %vm279, 0.0
          %289 = vst.msk [vmem:[#allocation2 + $0x48] sm:$0xff] %vm279, 0.0
          %290 = vst.msk [vmem:[#allocation2 + $0x50] sm:$0xff] %vm279, 0.0
          %291 = vst.msk [vmem:[#allocation2 + $0x58] sm:$0xff] %vm279, 0.0
          %292 = vst.msk [vmem:[#allocation2 + $0x60] sm:$0xff] %vm279, 0.0
          %293 = vst.msk [vmem:[#allocation2 + $0x68] sm:$0xff] %vm279, 0.0
          %294 = vst.msk [vmem:[#allocation2 + $0x70] sm:$0xff] %vm279, 0.0
          %295 = vst.msk [vmem:[#allocation2 + $0x78] sm:$0xff] %vm279, 0.0
          %296 = vst.msk [vmem:[#allocation2 + $0x80] sm:$0xff] %vm279, 0.0
          %297 = vst.msk [vmem:[#allocation2 + $0x88] sm:$0xff] %vm279, 0.0
          %298 = vst.msk [vmem:[#allocation2 + $0x90] sm:$0xff] %vm279, 0.0
          %299 = vst.msk [vmem:[#allocation2 + $0x98] sm:$0xff] %vm279, 0.0
          %300 = vst.msk [vmem:[#allocation2 + $0xa0] sm:$0xff] %vm279, 0.0
          %301 = vst.msk [vmem:[#allocation2 + $0xa8] sm:$0xff] %vm279, 0.0
          %302 = vst.msk [vmem:[#allocation2 + $0xb0] sm:$0xff] %vm279, 0.0
          %303 = vst.msk [vmem:[#allocation2 + $0xb8] sm:$0xff] %vm279, 0.0
          %304 = vst.msk [vmem:[#allocation2 + $0xc0] sm:$0xff] %vm279, 0.0
          %305 = vst.msk [vmem:[#allocation2 + $0xc8] sm:$0xff] %vm279, 0.0
          %306 = vst.msk [vmem:[#allocation2 + $0xd0] sm:$0xff] %vm279, 0.0
          %307 = vst.msk [vmem:[#allocation2 + $0xd8] sm:$0xff] %vm279, 0.0
          %308 = vst.msk [vmem:[#allocation2 + $0xe0] sm:$0xff] %vm279, 0.0
          %309 = vst.msk [vmem:[#allocation2 + $0xe8] sm:$0xff] %vm279, 0.0
          %310 = vst.msk [vmem:[#allocation2 + $0xf0] sm:$0xff] %vm279, 0.0
          %311 = vst.msk [vmem:[#allocation2 + $0xf8] sm:$0xff] %vm279, 0.0
          %312 = vst.msk [vmem:[#allocation2 + $0x100] sm:$0xff] %vm279, 0.0
          %313 = vst.msk [vmem:[#allocation2 + $0x108] sm:$0xff] %vm279, 0.0
          %314 = vst.msk [vmem:[#allocation2 + $0x110] sm:$0xff] %vm279, 0.0
          %315 = vst.msk [vmem:[#allocation2 + $0x118] sm:$0xff] %vm279, 0.0
          %316 = vst.msk [vmem:[#allocation2 + $0x120] sm:$0xff] %vm279, 0.0
          %317 = vst.msk [vmem:[#allocation2 + $0x128] sm:$0xff] %vm279, 0.0
          %318 = vst.msk [vmem:[#allocation2 + $0x130] sm:$0xff] %vm279, 0.0
          %319 = vst.msk [vmem:[#allocation2 + $0x138] sm:$0xff] %vm279, 0.0
          %320 = vst.msk [vmem:[#allocation2 + $0x140] sm:$0xff] %vm279, 0.0
          %321 = vst.msk [vmem:[#allocation2 + $0x148] sm:$0xff] %vm279, 0.0
          %322 = vst.msk [vmem:[#allocation2 + $0x150] sm:$0xff] %vm279, 0.0
          %323 = vst.msk [vmem:[#allocation2 + $0x158] sm:$0xff] %vm279, 0.0
          %324 = vst.msk [vmem:[#allocation2 + $0x160] sm:$0xff] %vm279, 0.0
          %325 = vst.msk [vmem:[#allocation2 + $0x168] sm:$0xff] %vm279, 0.0
          %326 = vst.msk [vmem:[#allocation2 + $0x170] sm:$0xff] %vm279, 0.0
          %327 = vst.msk [vmem:[#allocation2 + $0x178] sm:$0xff] %vm279, 0.0
          %328 = vst.msk [vmem:[#allocation2 + $0x180] sm:$0xff] %vm279, 0.0
          %329 = vst.msk [vmem:[#allocation2 + $0x188] sm:$0xff] %vm279, 0.0
          %330 = vst.msk [vmem:[#allocation2 + $0x190] sm:$0xff] %vm279, 0.0
          %331 = vst.msk [vmem:[#allocation2 + $0x198] sm:$0xff] %vm279, 0.0
          %332 = vst.msk [vmem:[#allocation2 + $0x1a0] sm:$0xff] %vm279, 0.0
          %333 = vst.msk [vmem:[#allocation2 + $0x1a8] sm:$0xff] %vm279, 0.0
          %334 = vst.msk [vmem:[#allocation2 + $0x1b0] sm:$0xff] %vm279, 0.0
          %335 = vst.msk [vmem:[#allocation2 + $0x1b8] sm:$0xff] %vm279, 0.0
          %336 = vst.msk [vmem:[#allocation2 + $0x1c0] sm:$0xff] %vm279, 0.0
          %337 = vst.msk [vmem:[#allocation2 + $0x1c8] sm:$0xff] %vm279, 0.0
          %338 = vst.msk [vmem:[#allocation2 + $0x1d0] sm:$0xff] %vm279, 0.0
          %339 = vst.msk [vmem:[#allocation2 + $0x1d8] sm:$0xff] %vm279, 0.0
          %340 = vst.msk [vmem:[#allocation2 + $0x1e0] sm:$0xff] %vm279, 0.0
          %341 = vst.msk [vmem:[#allocation2 + $0x1e8] sm:$0xff] %vm279, 0.0
          %342 = vst.msk [vmem:[#allocation2 + $0x1f0] sm:$0xff] %vm279, 0.0
          %343 = vst.msk [vmem:[#allocation2 + $0x1f8] sm:$0xff] %vm279, 0.0
        $region40: #{tpu_custom_call.1} parent=31 // pred_fallthru
          _
        %v344 = vld [vmem:[#allocation2] sm:$0xff]
        %v345 = vld [vmem:[#allocation2 + $0x8] sm:$0xff]
        %v346 = vld [vmem:[#allocation2 + $0x10] sm:$0xff]
        %v347 = vld [vmem:[#allocation2 + $0x18] sm:$0xff]
        %v348 = vld [vmem:[#allocation2 + $0x20] sm:$0xff]
        %v349 = vld [vmem:[#allocation2 + $0x28] sm:$0xff]
        %v350 = vld [vmem:[#allocation2 + $0x30] sm:$0xff]
        %v351 = vld [vmem:[#allocation2 + $0x38] sm:$0xff]
        %v352 = vld [vmem:[#allocation2 + $0x40] sm:$0xff]
        %v353 = vld [vmem:[#allocation2 + $0x48] sm:$0xff]
        %v354 = vld [vmem:[#allocation2 + $0x50] sm:$0xff]
        %v355 = vld [vmem:[#allocation2 + $0x58] sm:$0xff]
        %v356 = vld [vmem:[#allocation2 + $0x60] sm:$0xff]
        %v357 = vld [vmem:[#allocation2 + $0x68] sm:$0xff]
        %v358 = vld [vmem:[#allocation2 + $0x70] sm:$0xff]
        %v359 = vld [vmem:[#allocation2 + $0x78] sm:$0xff]
        %v360 = vld [vmem:[#allocation2 + $0x80] sm:$0xff]
        %v361 = vld [vmem:[#allocation2 + $0x88] sm:$0xff]
        %v362 = vld [vmem:[#allocation2 + $0x90] sm:$0xff]
        %v363 = vld [vmem:[#allocation2 + $0x98] sm:$0xff]
        %v364 = vld [vmem:[#allocation2 + $0xa0] sm:$0xff]
        %v365 = vld [vmem:[#allocation2 + $0xa8] sm:$0xff]
        %v366 = vld [vmem:[#allocation2 + $0xb0] sm:$0xff]
        %v367 = vld [vmem:[#allocation2 + $0xb8] sm:$0xff]
        %v368 = vld [vmem:[#allocation2 + $0xc0] sm:$0xff]
        %v369 = vld [vmem:[#allocation2 + $0xc8] sm:$0xff]
        %v370 = vld [vmem:[#allocation2 + $0xd0] sm:$0xff]
        %v371 = vld [vmem:[#allocation2 + $0xd8] sm:$0xff]
        %v372 = vld [vmem:[#allocation2 + $0xe0] sm:$0xff]
        %v373 = vld [vmem:[#allocation2 + $0xe8] sm:$0xff]
        %v374 = vld [vmem:[#allocation2 + $0xf0] sm:$0xff]
        %v375 = vld [vmem:[#allocation2 + $0xf8] sm:$0xff]
        %v376 = vld [vmem:[#allocation2 + $0x100] sm:$0xff]
        %v377 = vld [vmem:[#allocation2 + $0x108] sm:$0xff]
        %v378 = vld [vmem:[#allocation2 + $0x110] sm:$0xff]
        %v379 = vld [vmem:[#allocation2 + $0x118] sm:$0xff]
        %v380 = vld [vmem:[#allocation2 + $0x120] sm:$0xff]
        %v381 = vld [vmem:[#allocation2 + $0x128] sm:$0xff]
        %v382 = vld [vmem:[#allocation2 + $0x130] sm:$0xff]
        %v383 = vld [vmem:[#allocation2 + $0x138] sm:$0xff]
        %v384 = vld [vmem:[#allocation2 + $0x140] sm:$0xff]
        %v385 = vld [vmem:[#allocation2 + $0x148] sm:$0xff]
        %v386 = vld [vmem:[#allocation2 + $0x150] sm:$0xff]
        %v387 = vld [vmem:[#allocation2 + $0x158] sm:$0xff]
        %v388 = vld [vmem:[#allocation2 + $0x160] sm:$0xff]
        %v389 = vld [vmem:[#allocation2 + $0x168] sm:$0xff]
        %v390 = vld [vmem:[#allocation2 + $0x170] sm:$0xff]
        %v391 = vld [vmem:[#allocation2 + $0x178] sm:$0xff]
        %v392 = vld [vmem:[#allocation2 + $0x180] sm:$0xff]
        %v393 = vld [vmem:[#allocation2 + $0x188] sm:$0xff]
        %v394 = vld [vmem:[#allocation2 + $0x190] sm:$0xff]
        %v395 = vld [vmem:[#allocation2 + $0x198] sm:$0xff]
        %v396 = vld [vmem:[#allocation2 + $0x1a0] sm:$0xff]
        %v397 = vld [vmem:[#allocation2 + $0x1a8] sm:$0xff]
        %v398 = vld [vmem:[#allocation2 + $0x1b0] sm:$0xff]
        %v399 = vld [vmem:[#allocation2 + $0x1b8] sm:$0xff]
        %v400 = vld [vmem:[#allocation2 + $0x1c0] sm:$0xff]
        %v401 = vld [vmem:[#allocation2 + $0x1c8] sm:$0xff]
        %v402 = vld [vmem:[#allocation2 + $0x1d0] sm:$0xff]
        %v403 = vld [vmem:[#allocation2 + $0x1d8] sm:$0xff]
        %v404 = vld [vmem:[#allocation2 + $0x1e0] sm:$0xff]
        %v405 = vld [vmem:[#allocation2 + $0x1e8] sm:$0xff]
        %v406 = vld [vmem:[#allocation2 + $0x1f0] sm:$0xff]
        %v407 = vld [vmem:[#allocation2 + $0x1f8] sm:$0xff]
        %v408 = vld [vmem:[%s214] sm:$0xff]
        %v409 = vld [vmem:[%s214 + $0x8] sm:$0xff]
        %v410 = vld [vmem:[%s214 + $0x10] sm:$0xff]
        %v411 = vld [vmem:[%s214 + $0x18] sm:$0xff]
        %v412 = vld [vmem:[%s214 + $0x20] sm:$0xff]
        %v413 = vld [vmem:[%s214 + $0x28] sm:$0xff]
        %v414 = vld [vmem:[%s214 + $0x30] sm:$0xff]
        %v415 = vld [vmem:[%s214 + $0x38] sm:$0xff]
        %v416 = vld [vmem:[%s214 + $0x40] sm:$0xff]
        %v417 = vld [vmem:[%s214 + $0x48] sm:$0xff]
        %v418 = vld [vmem:[%s214 + $0x50] sm:$0xff]
        %v419 = vld [vmem:[%s214 + $0x58] sm:$0xff]
        %v420 = vld [vmem:[%s214 + $0x60] sm:$0xff]
        %v421 = vld [vmem:[%s214 + $0x68] sm:$0xff]
        %v422 = vld [vmem:[%s214 + $0x70] sm:$0xff]
        %v423 = vld [vmem:[%s214 + $0x78] sm:$0xff]
        %v424 = vld [vmem:[%s214 + $0x80] sm:$0xff]
        %v425 = vld [vmem:[%s214 + $0x88] sm:$0xff]
        %v426 = vld [vmem:[%s214 + $0x90] sm:$0xff]
        %v427 = vld [vmem:[%s214 + $0x98] sm:$0xff]
        %v428 = vld [vmem:[%s214 + $0xa0] sm:$0xff]
        %v429 = vld [vmem:[%s214 + $0xa8] sm:$0xff]
        %v430 = vld [vmem:[%s214 + $0xb0] sm:$0xff]
        %v431 = vld [vmem:[%s214 + $0xb8] sm:$0xff]
        %v432 = vld [vmem:[%s214 + $0xc0] sm:$0xff]
        %v433 = vld [vmem:[%s214 + $0xc8] sm:$0xff]
        %v434 = vld [vmem:[%s214 + $0xd0] sm:$0xff]
        %v435 = vld [vmem:[%s214 + $0xd8] sm:$0xff]
        %v436 = vld [vmem:[%s214 + $0xe0] sm:$0xff]
        %v437 = vld [vmem:[%s214 + $0xe8] sm:$0xff]
        %v438 = vld [vmem:[%s214 + $0xf0] sm:$0xff]
        %v439 = vld [vmem:[%s214 + $0xf8] sm:$0xff]
        %v440 = vld [vmem:[%s214 + $0x100] sm:$0xff]
        %v441 = vld [vmem:[%s214 + $0x108] sm:$0xff]
        %v442 = vld [vmem:[%s214 + $0x110] sm:$0xff]
        %v443 = vld [vmem:[%s214 + $0x118] sm:$0xff]
        %v444 = vld [vmem:[%s214 + $0x120] sm:$0xff]
        %v445 = vld [vmem:[%s214 + $0x128] sm:$0xff]
        %v446 = vld [vmem:[%s214 + $0x130] sm:$0xff]
        %v447 = vld [vmem:[%s214 + $0x138] sm:$0xff]
        %v448 = vld [vmem:[%s214 + $0x140] sm:$0xff]
        %v449 = vld [vmem:[%s214 + $0x148] sm:$0xff]
        %v450 = vld [vmem:[%s214 + $0x150] sm:$0xff]
        %v451 = vld [vmem:[%s214 + $0x158] sm:$0xff]
        %v452 = vld [vmem:[%s214 + $0x160] sm:$0xff]
        %v453 = vld [vmem:[%s214 + $0x168] sm:$0xff]
        %v454 = vld [vmem:[%s214 + $0x170] sm:$0xff]
        %v455 = vld [vmem:[%s214 + $0x178] sm:$0xff]
        %v456 = vld [vmem:[%s214 + $0x180] sm:$0xff]
        %v457 = vld [vmem:[%s214 + $0x188] sm:$0xff]
        %v458 = vld [vmem:[%s214 + $0x190] sm:$0xff]
        %v459 = vld [vmem:[%s214 + $0x198] sm:$0xff]
        %v460 = vld [vmem:[%s214 + $0x1a0] sm:$0xff]
        %v461 = vld [vmem:[%s214 + $0x1a8] sm:$0xff]
        %v462 = vld [vmem:[%s214 + $0x1b0] sm:$0xff]
        %v463 = vld [vmem:[%s214 + $0x1b8] sm:$0xff]
        %v464 = vld [vmem:[%s214 + $0x1c0] sm:$0xff]
        %v465 = vld [vmem:[%s214 + $0x1c8] sm:$0xff]
        %v466 = vld [vmem:[%s214 + $0x1d0] sm:$0xff]
        %v467 = vld [vmem:[%s214 + $0x1d8] sm:$0xff]
        %v468 = vld [vmem:[%s214 + $0x1e0] sm:$0xff]
        %v469 = vld [vmem:[%s214 + $0x1e8] sm:$0xff]
        %v470 = vld [vmem:[%s214 + $0x1f0] sm:$0xff]
        %v471 = vld [vmem:[%s214 + $0x1f8] sm:$0xff]
        %v472 = vld [vmem:[%s261] sm:$0xf]
        %v473 = vld [vmem:[%s261 + $0x4] sm:$0xf]
        %v474 = vld [vmem:[%s261 + $0x8] sm:$0xf]
        %v475 = vld [vmem:[%s261 + $0xc] sm:$0xf]
        %v476 = vld [vmem:[%s261 + $0x10] sm:$0xf]
        %v477 = vld [vmem:[%s261 + $0x14] sm:$0xf]
        %v478 = vld [vmem:[%s261 + $0x18] sm:$0xf]
        %v479 = vld [vmem:[%s261 + $0x1c] sm:$0xf]
        %v480 = vld [vmem:[%s261 + $0x20] sm:$0xf]
        %v481 = vld [vmem:[%s261 + $0x24] sm:$0xf]
        %v482 = vld [vmem:[%s261 + $0x28] sm:$0xf]
        %v483 = vld [vmem:[%s261 + $0x2c] sm:$0xf]
        %v484 = vld [vmem:[%s261 + $0x30] sm:$0xf]
        %v485 = vld [vmem:[%s261 + $0x34] sm:$0xf]
        %v486 = vld [vmem:[%s261 + $0x38] sm:$0xf]
        %v487 = vld [vmem:[%s261 + $0x3c] sm:$0xf]
        %v488 = vld [vmem:[%s261 + $0x40] sm:$0xf]
        %v489 = vld [vmem:[%s261 + $0x44] sm:$0xf]
        %v490 = vld [vmem:[%s261 + $0x48] sm:$0xf]
        %v491 = vld [vmem:[%s261 + $0x4c] sm:$0xf]
        %v492 = vld [vmem:[%s261 + $0x50] sm:$0xf]
        %v493 = vld [vmem:[%s261 + $0x54] sm:$0xf]
        %v494 = vld [vmem:[%s261 + $0x58] sm:$0xf]
        %v495 = vld [vmem:[%s261 + $0x5c] sm:$0xf]
        %v496 = vld [vmem:[%s261 + $0x60] sm:$0xf]
        %v497 = vld [vmem:[%s261 + $0x64] sm:$0xf]
        %v498 = vld [vmem:[%s261 + $0x68] sm:$0xf]
        %v499 = vld [vmem:[%s261 + $0x6c] sm:$0xf]
        %v500 = vld [vmem:[%s261 + $0x70] sm:$0xf]
        %v501 = vld [vmem:[%s261 + $0x74] sm:$0xf]
        %v502 = vld [vmem:[%s261 + $0x78] sm:$0xf]
        %v503 = vld [vmem:[%s261 + $0x7c] sm:$0xf]
        %v568 = vunpack.c.l.b16 %v408
        %v569 = vunpack.c.h.b16 %v408
        %v570 = vunpack.c.l.b16 %v409
        %v571 = vunpack.c.h.b16 %v409
        %v572 = vunpack.c.l.b16 %v410
        %v573 = vunpack.c.h.b16 %v410
        %v574 = vunpack.c.l.b16 %v411
        %v575 = vunpack.c.h.b16 %v411
        %v576 = vunpack.c.l.b16 %v412
        %v577 = vunpack.c.h.b16 %v412
        %v578 = vunpack.c.l.b16 %v413
        %v579 = vunpack.c.h.b16 %v413
        %v580 = vunpack.c.l.b16 %v414
        %v581 = vunpack.c.h.b16 %v414
        %v582 = vunpack.c.l.b16 %v415
        %v583 = vunpack.c.h.b16 %v415
        %v584 = vunpack.c.l.b16 %v416
        %v585 = vunpack.c.h.b16 %v416
        %v586 = vunpack.c.l.b16 %v417
        %v587 = vunpack.c.h.b16 %v417
        %v588 = vunpack.c.l.b16 %v418
        %v589 = vunpack.c.h.b16 %v418
        %v590 = vunpack.c.l.b16 %v419
        %v591 = vunpack.c.h.b16 %v419
        %v592 = vunpack.c.l.b16 %v420
        %v593 = vunpack.c.h.b16 %v420
        %v594 = vunpack.c.l.b16 %v421
        %v595 = vunpack.c.h.b16 %v421
        %v596 = vunpack.c.l.b16 %v422
        %v597 = vunpack.c.h.b16 %v422
        %v598 = vunpack.c.l.b16 %v423
        %v599 = vunpack.c.h.b16 %v423
        %v600 = vunpack.c.l.b16 %v424
        %v601 = vunpack.c.h.b16 %v424
        %v602 = vunpack.c.l.b16 %v425
        %v603 = vunpack.c.h.b16 %v425
        %v604 = vunpack.c.l.b16 %v426
        %v605 = vunpack.c.h.b16 %v426
        %v606 = vunpack.c.l.b16 %v427
        %v607 = vunpack.c.h.b16 %v427
        %v608 = vunpack.c.l.b16 %v428
        %v609 = vunpack.c.h.b16 %v428
        %v610 = vunpack.c.l.b16 %v429
        %v611 = vunpack.c.h.b16 %v429
        %v612 = vunpack.c.l.b16 %v430
        %v613 = vunpack.c.h.b16 %v430
        %v614 = vunpack.c.l.b16 %v431
        %v615 = vunpack.c.h.b16 %v431
        %v616 = vunpack.c.l.b16 %v432
        %v617 = vunpack.c.h.b16 %v432
        %v618 = vunpack.c.l.b16 %v433
        %v619 = vunpack.c.h.b16 %v433
        %v620 = vunpack.c.l.b16 %v434
        %v621 = vunpack.c.h.b16 %v434
        %v622 = vunpack.c.l.b16 %v435
        %v623 = vunpack.c.h.b16 %v435
        %v624 = vunpack.c.l.b16 %v436
        %v625 = vunpack.c.h.b16 %v436
        %v626 = vunpack.c.l.b16 %v437
        %v627 = vunpack.c.h.b16 %v437
        %v628 = vunpack.c.l.b16 %v438
        %v629 = vunpack.c.h.b16 %v438
        %v630 = vunpack.c.l.b16 %v439
        %v631 = vunpack.c.h.b16 %v439
        %v632 = vunpack.c.l.b16 %v440
        %v633 = vunpack.c.h.b16 %v440
        %v634 = vunpack.c.l.b16 %v441
        %v635 = vunpack.c.h.b16 %v441
        %v636 = vunpack.c.l.b16 %v442
        %v637 = vunpack.c.h.b16 %v442
        %v638 = vunpack.c.l.b16 %v443
        %v639 = vunpack.c.h.b16 %v443
        %v640 = vunpack.c.l.b16 %v444
        %v641 = vunpack.c.h.b16 %v444
        %v642 = vunpack.c.l.b16 %v445
        %v643 = vunpack.c.h.b16 %v445
        %v644 = vunpack.c.l.b16 %v446
        %v645 = vunpack.c.h.b16 %v446
        %v646 = vunpack.c.l.b16 %v447
        %v647 = vunpack.c.h.b16 %v447
        %v648 = vunpack.c.l.b16 %v448
        %v649 = vunpack.c.h.b16 %v448
        %v650 = vunpack.c.l.b16 %v449
        %v651 = vunpack.c.h.b16 %v449
        %v652 = vunpack.c.l.b16 %v450
        %v653 = vunpack.c.h.b16 %v450
        %v654 = vunpack.c.l.b16 %v451
        %v655 = vunpack.c.h.b16 %v451
        %v656 = vunpack.c.l.b16 %v452
        %v657 = vunpack.c.h.b16 %v452
        %v658 = vunpack.c.l.b16 %v453
        %v659 = vunpack.c.h.b16 %v453
        %v660 = vunpack.c.l.b16 %v454
        %v661 = vunpack.c.h.b16 %v454
        %v662 = vunpack.c.l.b16 %v455
        %v663 = vunpack.c.h.b16 %v455
        %v664 = vunpack.c.l.b16 %v456
        %v665 = vunpack.c.h.b16 %v456
        %v666 = vunpack.c.l.b16 %v457
        %v667 = vunpack.c.h.b16 %v457
        %v668 = vunpack.c.l.b16 %v458
        %v669 = vunpack.c.h.b16 %v458
        %v670 = vunpack.c.l.b16 %v459
        %v671 = vunpack.c.h.b16 %v459
        %v672 = vunpack.c.l.b16 %v460
        %v673 = vunpack.c.h.b16 %v460
        %v674 = vunpack.c.l.b16 %v461
        %v675 = vunpack.c.h.b16 %v461
        %v676 = vunpack.c.l.b16 %v462
        %v677 = vunpack.c.h.b16 %v462
        %v678 = vunpack.c.l.b16 %v463
        %v679 = vunpack.c.h.b16 %v463
        %v680 = vunpack.c.l.b16 %v464
        %v681 = vunpack.c.h.b16 %v464
        %v682 = vunpack.c.l.b16 %v465
        %v683 = vunpack.c.h.b16 %v465
        %v684 = vunpack.c.l.b16 %v466
        %v685 = vunpack.c.h.b16 %v466
        %v686 = vunpack.c.l.b16 %v467
        %v687 = vunpack.c.h.b16 %v467
        %v688 = vunpack.c.l.b16 %v468
        %v689 = vunpack.c.h.b16 %v468
        %v690 = vunpack.c.l.b16 %v469
        %v691 = vunpack.c.h.b16 %v469
        %v692 = vunpack.c.l.b16 %v470
        %v693 = vunpack.c.h.b16 %v470
        %v694 = vunpack.c.l.b16 %v471
        %v695 = vunpack.c.h.b16 %v471
        %v696 = vpack.c.b16 %v570, %v568
        %v697 = vpack.c.b16 %v571, %v569
        %v698 = vpack.c.b16 %v574, %v572
        %v699 = vpack.c.b16 %v575, %v573
        %v700 = vpack.c.b16 %v578, %v576
        %v701 = vpack.c.b16 %v579, %v577
        %v702 = vpack.c.b16 %v582, %v580
        %v703 = vpack.c.b16 %v583, %v581
        %v704 = vpack.c.b16 %v586, %v584
        %v705 = vpack.c.b16 %v587, %v585
        %v706 = vpack.c.b16 %v590, %v588
        %v707 = vpack.c.b16 %v591, %v589
        %v708 = vpack.c.b16 %v594, %v592
        %v709 = vpack.c.b16 %v595, %v593
        %v710 = vpack.c.b16 %v598, %v596
        %v711 = vpack.c.b16 %v599, %v597
        %v712 = vpack.c.b16 %v602, %v600
        %v713 = vpack.c.b16 %v603, %v601
        %v714 = vpack.c.b16 %v606, %v604
        %v715 = vpack.c.b16 %v607, %v605
        %v716 = vpack.c.b16 %v610, %v608
        %v717 = vpack.c.b16 %v611, %v609
        %v718 = vpack.c.b16 %v614, %v612
        %v719 = vpack.c.b16 %v615, %v613
        %v720 = vpack.c.b16 %v618, %v616
        %v721 = vpack.c.b16 %v619, %v617
        %v722 = vpack.c.b16 %v622, %v620
        %v723 = vpack.c.b16 %v623, %v621
        %v724 = vpack.c.b16 %v626, %v624
        %v725 = vpack.c.b16 %v627, %v625
        %v726 = vpack.c.b16 %v630, %v628
        %v727 = vpack.c.b16 %v631, %v629
        %v728 = vpack.c.b16 %v634, %v632
        %v729 = vpack.c.b16 %v635, %v633
        %v730 = vpack.c.b16 %v638, %v636
        %v731 = vpack.c.b16 %v639, %v637
        %v732 = vpack.c.b16 %v642, %v640
        %v733 = vpack.c.b16 %v643, %v641
        %v734 = vpack.c.b16 %v646, %v644
        %v735 = vpack.c.b16 %v647, %v645
        %v736 = vpack.c.b16 %v650, %v648
        %v737 = vpack.c.b16 %v651, %v649
        %v738 = vpack.c.b16 %v654, %v652
        %v739 = vpack.c.b16 %v655, %v653
        %v740 = vpack.c.b16 %v658, %v656
        %v741 = vpack.c.b16 %v659, %v657
        %v742 = vpack.c.b16 %v662, %v660
        %v743 = vpack.c.b16 %v663, %v661
        %v744 = vpack.c.b16 %v666, %v664
        %v745 = vpack.c.b16 %v667, %v665
        %v746 = vpack.c.b16 %v670, %v668
        %v747 = vpack.c.b16 %v671, %v669
        %v748 = vpack.c.b16 %v674, %v672
        %v749 = vpack.c.b16 %v675, %v673
        %v750 = vpack.c.b16 %v678, %v676
        %v751 = vpack.c.b16 %v679, %v677
        %v752 = vpack.c.b16 %v682, %v680
        %v753 = vpack.c.b16 %v683, %v681
        %v754 = vpack.c.b16 %v686, %v684
        %v755 = vpack.c.b16 %v687, %v685
        %v756 = vpack.c.b16 %v690, %v688
        %v757 = vpack.c.b16 %v691, %v689
        %v758 = vpack.c.b16 %v694, %v692
        %v759 = vpack.c.b16 %v695, %v693
        %v856 = vunpack.c.l.b16 %v472
        %v857 = vunpack.c.l.b16 %v473
        %v858 = vunpack.c.l.b16 %v474
        %v859 = vunpack.c.l.b16 %v475
        %v860 = vunpack.c.l.b16 %v476
        %v861 = vunpack.c.l.b16 %v477
        %v862 = vunpack.c.l.b16 %v478
        %v863 = vunpack.c.l.b16 %v479
        %v864 = vunpack.c.l.b16 %v480
        %v865 = vunpack.c.l.b16 %v481
        %v866 = vunpack.c.l.b16 %v482
        %v867 = vunpack.c.l.b16 %v483
        %v868 = vunpack.c.l.b16 %v484
        %v869 = vunpack.c.l.b16 %v485
        %v870 = vunpack.c.l.b16 %v486
        %v871 = vunpack.c.l.b16 %v487
        %v872 = vunpack.c.l.b16 %v488
        %v873 = vunpack.c.l.b16 %v489
        %v874 = vunpack.c.l.b16 %v490
        %v875 = vunpack.c.l.b16 %v491
        %v876 = vunpack.c.l.b16 %v492
        %v877 = vunpack.c.l.b16 %v493
        %v878 = vunpack.c.l.b16 %v494
        %v879 = vunpack.c.l.b16 %v495
        %v880 = vunpack.c.l.b16 %v496
        %v881 = vunpack.c.l.b16 %v497
        %v882 = vunpack.c.l.b16 %v498
        %v883 = vunpack.c.l.b16 %v499
        %v884 = vunpack.c.l.b16 %v500
        %v885 = vunpack.c.l.b16 %v501
        %v886 = vunpack.c.l.b16 %v502
        %v887 = vunpack.c.l.b16 %v503
        %v888 = vpack.c.b16 %v857, %v856
        %v889 = vpack.c.b16 %v859, %v858
        %v890 = vpack.c.b16 %v861, %v860
        %v891 = vpack.c.b16 %v863, %v862
        %v892 = vpack.c.b16 %v865, %v864
        %v893 = vpack.c.b16 %v867, %v866
        %v894 = vpack.c.b16 %v869, %v868
        %v895 = vpack.c.b16 %v871, %v870
        %v896 = vpack.c.b16 %v873, %v872
        %v897 = vpack.c.b16 %v875, %v874
        %v898 = vpack.c.b16 %v877, %v876
        %v899 = vpack.c.b16 %v879, %v878
        %v900 = vpack.c.b16 %v881, %v880
        %v901 = vpack.c.b16 %v883, %v882
        %v902 = vpack.c.b16 %v885, %v884
        %v903 = vpack.c.b16 %v887, %v886
        %920 = vmatpush.bf16.msra.mxu0 %v895
        %921 = vmatpush.bf16.msra.mxu0 %v894
        %922 = vmatpush.bf16.msra.mxu0 %v893
        %923 = vmatpush.bf16.msra.mxu0 %v892
        %924 = vmatpush.bf16.msra.mxu0 %v891
        %925 = vmatpush.bf16.msra.mxu0 %v890
        %926 = vmatpush.bf16.msra.mxu0 %v889
        %927 = vmatpush.bf16.msra.mxu0 %v888
        %928 = vmatmul.bf16.gmra.mxu0 %v696
        %v929 = vpop.f32.mrf.mxu0
        %v930 = vadd.f32 0.0, %v929
        %v931 = vpop.f32.mrf.mxu0
        %v932 = vadd.f32 0.0, %v931
        %933 = vmatmul.bf16.gmra.mxu0 %v698
        %v934 = vpop.f32.mrf.mxu0
        %v935 = vadd.f32 0.0, %v934
        %v936 = vpop.f32.mrf.mxu0
        %v937 = vadd.f32 0.0, %v936
        %938 = vmatmul.bf16.gmra.mxu0 %v700
        %v939 = vpop.f32.mrf.mxu0
        %v940 = vadd.f32 0.0, %v939
        %v941 = vpop.f32.mrf.mxu0
        %v942 = vadd.f32 0.0, %v941
        %943 = vmatmul.bf16.gmra.mxu0 %v702
        %v944 = vpop.f32.mrf.mxu0
        %v945 = vadd.f32 0.0, %v944
        %v946 = vpop.f32.mrf.mxu0
        %v947 = vadd.f32 0.0, %v946
        %948 = vmatmul.bf16.gmra.mxu0 %v704
        %v949 = vpop.f32.mrf.mxu0
        %v950 = vadd.f32 0.0, %v949
        %v951 = vpop.f32.mrf.mxu0
        %v952 = vadd.f32 0.0, %v951
        %953 = vmatmul.bf16.gmra.mxu0 %v706
        %v954 = vpop.f32.mrf.mxu0
        %v955 = vadd.f32 0.0, %v954
        %v956 = vpop.f32.mrf.mxu0
        %v957 = vadd.f32 0.0, %v956
        %958 = vmatmul.bf16.gmra.mxu0 %v708
        %v959 = vpop.f32.mrf.mxu0
        %v960 = vadd.f32 0.0, %v959
        %v961 = vpop.f32.mrf.mxu0
        %v962 = vadd.f32 0.0, %v961
        %963 = vmatmul.bf16.gmra.mxu0 %v710
        %v964 = vpop.f32.mrf.mxu0
        %v965 = vadd.f32 0.0, %v964
        %v966 = vpop.f32.mrf.mxu0
        %v967 = vadd.f32 0.0, %v966
        %968 = vmatmul.bf16.gmra.mxu0 %v712
        %v969 = vpop.f32.mrf.mxu0
        %v970 = vadd.f32 0.0, %v969
        %v971 = vpop.f32.mrf.mxu0
        %v972 = vadd.f32 0.0, %v971
        %973 = vmatmul.bf16.gmra.mxu0 %v714
        %v974 = vpop.f32.mrf.mxu0
        %v975 = vadd.f32 0.0, %v974
        %v976 = vpop.f32.mrf.mxu0
        %v977 = vadd.f32 0.0, %v976
        %978 = vmatmul.bf16.gmra.mxu0 %v716
        %v979 = vpop.f32.mrf.mxu0
        %v980 = vadd.f32 0.0, %v979
        %v981 = vpop.f32.mrf.mxu0
        %v982 = vadd.f32 0.0, %v981
        %983 = vmatmul.bf16.gmra.mxu0 %v718
        %v984 = vpop.f32.mrf.mxu0
        %v985 = vadd.f32 0.0, %v984
        %v986 = vpop.f32.mrf.mxu0
        %v987 = vadd.f32 0.0, %v986
        %988 = vmatmul.bf16.gmra.mxu0 %v720
        %v989 = vpop.f32.mrf.mxu0
        %v990 = vadd.f32 0.0, %v989
        %v991 = vpop.f32.mrf.mxu0
        %v992 = vadd.f32 0.0, %v991
        %993 = vmatmul.bf16.gmra.mxu0 %v722
        %v994 = vpop.f32.mrf.mxu0
        %v995 = vadd.f32 0.0, %v994
        %v996 = vpop.f32.mrf.mxu0
        %v997 = vadd.f32 0.0, %v996
        %998 = vmatmul.bf16.gmra.mxu0 %v724
        %v999 = vpop.f32.mrf.mxu0
        %v1000 = vadd.f32 0.0, %v999
        %v1001 = vpop.f32.mrf.mxu0
        %v1002 = vadd.f32 0.0, %v1001
        %1003 = vmatmul.bf16.gmra.mxu0 %v726
        %v1004 = vpop.f32.mrf.mxu0
        %v1005 = vadd.f32 0.0, %v1004
        %v1006 = vpop.f32.mrf.mxu0
        %v1007 = vadd.f32 0.0, %v1006
        %1008 = vmatmul.bf16.gmra.mxu0 %v728
        %v1009 = vpop.f32.mrf.mxu0
        %v1010 = vadd.f32 0.0, %v1009
        %v1011 = vpop.f32.mrf.mxu0
        %v1012 = vadd.f32 0.0, %v1011
        %1013 = vmatmul.bf16.gmra.mxu0 %v730
        %v1014 = vpop.f32.mrf.mxu0
        %v1015 = vadd.f32 0.0, %v1014
        %v1016 = vpop.f32.mrf.mxu0
        %v1017 = vadd.f32 0.0, %v1016
        %1018 = vmatmul.bf16.gmra.mxu0 %v732
        %v1019 = vpop.f32.mrf.mxu0
        %v1020 = vadd.f32 0.0, %v1019
        %v1021 = vpop.f32.mrf.mxu0
        %v1022 = vadd.f32 0.0, %v1021
        %1023 = vmatmul.bf16.gmra.mxu0 %v734
        %v1024 = vpop.f32.mrf.mxu0
        %v1025 = vadd.f32 0.0, %v1024
        %v1026 = vpop.f32.mrf.mxu0
        %v1027 = vadd.f32 0.0, %v1026
        %1028 = vmatmul.bf16.gmra.mxu0 %v736
        %v1029 = vpop.f32.mrf.mxu0
        %v1030 = vadd.f32 0.0, %v1029
        %v1031 = vpop.f32.mrf.mxu0
        %v1032 = vadd.f32 0.0, %v1031
        %1033 = vmatmul.bf16.gmra.mxu0 %v738
        %v1034 = vpop.f32.mrf.mxu0
        %v1035 = vadd.f32 0.0, %v1034
        %v1036 = vpop.f32.mrf.mxu0
        %v1037 = vadd.f32 0.0, %v1036
        %1038 = vmatmul.bf16.gmra.mxu0 %v740
        %v1039 = vpop.f32.mrf.mxu0
        %v1040 = vadd.f32 0.0, %v1039
        %v1041 = vpop.f32.mrf.mxu0
        %v1042 = vadd.f32 0.0, %v1041
        %1043 = vmatmul.bf16.gmra.mxu0 %v742
        %v1044 = vpop.f32.mrf.mxu0
        %v1045 = vadd.f32 0.0, %v1044
        %v1046 = vpop.f32.mrf.mxu0
        %v1047 = vadd.f32 0.0, %v1046
        %1048 = vmatmul.bf16.gmra.mxu0 %v744
        %v1049 = vpop.f32.mrf.mxu0
        %v1050 = vadd.f32 0.0, %v1049
        %v1051 = vpop.f32.mrf.mxu0
        %v1052 = vadd.f32 0.0, %v1051
        %1053 = vmatmul.bf16.gmra.mxu0 %v746
        %v1054 = vpop.f32.mrf.mxu0
        %v1055 = vadd.f32 0.0, %v1054
        %v1056 = vpop.f32.mrf.mxu0
        %v1057 = vadd.f32 0.0, %v1056
        %1058 = vmatmul.bf16.gmra.mxu0 %v748
        %v1059 = vpop.f32.mrf.mxu0
        %v1060 = vadd.f32 0.0, %v1059
        %v1061 = vpop.f32.mrf.mxu0
        %v1062 = vadd.f32 0.0, %v1061
        %1063 = vmatmul.bf16.gmra.mxu0 %v750
        %v1064 = vpop.f32.mrf.mxu0
        %v1065 = vadd.f32 0.0, %v1064
        %v1066 = vpop.f32.mrf.mxu0
        %v1067 = vadd.f32 0.0, %v1066
        %1068 = vmatmul.bf16.gmra.mxu0 %v752
        %v1069 = vpop.f32.mrf.mxu0
        %v1070 = vadd.f32 0.0, %v1069
        %v1071 = vpop.f32.mrf.mxu0
        %v1072 = vadd.f32 0.0, %v1071
        %1073 = vmatmul.bf16.gmra.mxu0 %v754
        %v1074 = vpop.f32.mrf.mxu0
        %v1075 = vadd.f32 0.0, %v1074
        %v1076 = vpop.f32.mrf.mxu0
        %v1077 = vadd.f32 0.0, %v1076
        %1078 = vmatmul.bf16.gmra.mxu0 %v756
        %v1079 = vpop.f32.mrf.mxu0
        %v1080 = vadd.f32 0.0, %v1079
        %v1081 = vpop.f32.mrf.mxu0
        %v1082 = vadd.f32 0.0, %v1081
        %1083 = vmatmul.bf16.gmra.mxu0 %v758
        %v1084 = vpop.f32.mrf.mxu0
        %v1085 = vadd.f32 0.0, %v1084
        %v1086 = vpop.f32.mrf.mxu0
        %v1087 = vadd.f32 0.0, %v1086
        %1088 = vdwg.mxu0
        %1089 = vmatpush.bf16.msra.mxu0 %v903
        %1090 = vmatpush.bf16.msra.mxu0 %v902
        %1091 = vmatpush.bf16.msra.mxu0 %v901
        %1092 = vmatpush.bf16.msra.mxu0 %v900
        %1093 = vmatpush.bf16.msra.mxu0 %v899
        %1094 = vmatpush.bf16.msra.mxu0 %v898
        %1095 = vmatpush.bf16.msra.mxu0 %v897
        %1096 = vmatpush.bf16.msra.mxu0 %v896
        %1097 = vmatmul.bf16.gmra.mxu0 %v697
        %v1098 = vpop.f32.mrf.mxu0
        %v1099 = vadd.f32 %v930, %v1098
        %v1100 = vpop.f32.mrf.mxu0
        %v1101 = vadd.f32 %v932, %v1100
        %1102 = vmatmul.bf16.gmra.mxu0 %v699
        %v1103 = vpop.f32.mrf.mxu0
        %v1104 = vadd.f32 %v935, %v1103
        %v1105 = vpop.f32.mrf.mxu0
        %v1106 = vadd.f32 %v937, %v1105
        %1107 = vmatmul.bf16.gmra.mxu0 %v701
        %v1108 = vpop.f32.mrf.mxu0
        %v1109 = vadd.f32 %v940, %v1108
        %v1110 = vpop.f32.mrf.mxu0
        %v1111 = vadd.f32 %v942, %v1110
        %1112 = vmatmul.bf16.gmra.mxu0 %v703
        %v1113 = vpop.f32.mrf.mxu0
        %v1114 = vadd.f32 %v945, %v1113
        %v1115 = vpop.f32.mrf.mxu0
        %v1116 = vadd.f32 %v947, %v1115
        %1117 = vmatmul.bf16.gmra.mxu0 %v705
        %v1118 = vpop.f32.mrf.mxu0
        %v1119 = vadd.f32 %v950, %v1118
        %v1120 = vpop.f32.mrf.mxu0
        %v1121 = vadd.f32 %v952, %v1120
        %1122 = vmatmul.bf16.gmra.mxu0 %v707
        %v1123 = vpop.f32.mrf.mxu0
        %v1124 = vadd.f32 %v955, %v1123
        %v1125 = vpop.f32.mrf.mxu0
        %v1126 = vadd.f32 %v957, %v1125
        %1127 = vmatmul.bf16.gmra.mxu0 %v709
        %v1128 = vpop.f32.mrf.mxu0
        %v1129 = vadd.f32 %v960, %v1128
        %v1130 = vpop.f32.mrf.mxu0
        %v1131 = vadd.f32 %v962, %v1130
        %1132 = vmatmul.bf16.gmra.mxu0 %v711
        %v1133 = vpop.f32.mrf.mxu0
        %v1134 = vadd.f32 %v965, %v1133
        %v1135 = vpop.f32.mrf.mxu0
        %v1136 = vadd.f32 %v967, %v1135
        %1137 = vmatmul.bf16.gmra.mxu0 %v713
        %v1138 = vpop.f32.mrf.mxu0
        %v1139 = vadd.f32 %v970, %v1138
        %v1140 = vpop.f32.mrf.mxu0
        %v1141 = vadd.f32 %v972, %v1140
        %1142 = vmatmul.bf16.gmra.mxu0 %v715
        %v1143 = vpop.f32.mrf.mxu0
        %v1144 = vadd.f32 %v975, %v1143
        %v1145 = vpop.f32.mrf.mxu0
        %v1146 = vadd.f32 %v977, %v1145
        %1147 = vmatmul.bf16.gmra.mxu0 %v717
        %v1148 = vpop.f32.mrf.mxu0
        %v1149 = vadd.f32 %v980, %v1148
        %v1150 = vpop.f32.mrf.mxu0
        %v1151 = vadd.f32 %v982, %v1150
        %1152 = vmatmul.bf16.gmra.mxu0 %v719
        %v1153 = vpop.f32.mrf.mxu0
        %v1154 = vadd.f32 %v985, %v1153
        %v1155 = vpop.f32.mrf.mxu0
        %v1156 = vadd.f32 %v987, %v1155
        %1157 = vmatmul.bf16.gmra.mxu0 %v721
        %v1158 = vpop.f32.mrf.mxu0
        %v1159 = vadd.f32 %v990, %v1158
        %v1160 = vpop.f32.mrf.mxu0
        %v1161 = vadd.f32 %v992, %v1160
        %1162 = vmatmul.bf16.gmra.mxu0 %v723
        %v1163 = vpop.f32.mrf.mxu0
        %v1164 = vadd.f32 %v995, %v1163
        %v1165 = vpop.f32.mrf.mxu0
        %v1166 = vadd.f32 %v997, %v1165
        %1167 = vmatmul.bf16.gmra.mxu0 %v725
        %v1168 = vpop.f32.mrf.mxu0
        %v1169 = vadd.f32 %v1000, %v1168
        %v1170 = vpop.f32.mrf.mxu0
        %v1171 = vadd.f32 %v1002, %v1170
        %1172 = vmatmul.bf16.gmra.mxu0 %v727
        %v1173 = vpop.f32.mrf.mxu0
        %v1174 = vadd.f32 %v1005, %v1173
        %v1175 = vpop.f32.mrf.mxu0
        %v1176 = vadd.f32 %v1007, %v1175
        %1177 = vmatmul.bf16.gmra.mxu0 %v729
        %v1178 = vpop.f32.mrf.mxu0
        %v1179 = vadd.f32 %v1010, %v1178
        %v1180 = vpop.f32.mrf.mxu0
        %v1181 = vadd.f32 %v1012, %v1180
        %1182 = vmatmul.bf16.gmra.mxu0 %v731
        %v1183 = vpop.f32.mrf.mxu0
        %v1184 = vadd.f32 %v1015, %v1183
        %v1185 = vpop.f32.mrf.mxu0
        %v1186 = vadd.f32 %v1017, %v1185
        %1187 = vmatmul.bf16.gmra.mxu0 %v733
        %v1188 = vpop.f32.mrf.mxu0
        %v1189 = vadd.f32 %v1020, %v1188
        %v1190 = vpop.f32.mrf.mxu0
        %v1191 = vadd.f32 %v1022, %v1190
        %1192 = vmatmul.bf16.gmra.mxu0 %v735
        %v1193 = vpop.f32.mrf.mxu0
        %v1194 = vadd.f32 %v1025, %v1193
        %v1195 = vpop.f32.mrf.mxu0
        %v1196 = vadd.f32 %v1027, %v1195
        %1197 = vmatmul.bf16.gmra.mxu0 %v737
        %v1198 = vpop.f32.mrf.mxu0
        %v1199 = vadd.f32 %v1030, %v1198
        %v1200 = vpop.f32.mrf.mxu0
        %v1201 = vadd.f32 %v1032, %v1200
        %1202 = vmatmul.bf16.gmra.mxu0 %v739
        %v1203 = vpop.f32.mrf.mxu0
        %v1204 = vadd.f32 %v1035, %v1203
        %v1205 = vpop.f32.mrf.mxu0
        %v1206 = vadd.f32 %v1037, %v1205
        %1207 = vmatmul.bf16.gmra.mxu0 %v741
        %v1208 = vpop.f32.mrf.mxu0
        %v1209 = vadd.f32 %v1040, %v1208
        %v1210 = vpop.f32.mrf.mxu0
        %v1211 = vadd.f32 %v1042, %v1210
        %1212 = vmatmul.bf16.gmra.mxu0 %v743
        %v1213 = vpop.f32.mrf.mxu0
        %v1214 = vadd.f32 %v1045, %v1213
        %v1215 = vpop.f32.mrf.mxu0
        %v1216 = vadd.f32 %v1047, %v1215
        %1217 = vmatmul.bf16.gmra.mxu0 %v745
        %v1218 = vpop.f32.mrf.mxu0
        %v1219 = vadd.f32 %v1050, %v1218
        %v1220 = vpop.f32.mrf.mxu0
        %v1221 = vadd.f32 %v1052, %v1220
        %1222 = vmatmul.bf16.gmra.mxu0 %v747
        %v1223 = vpop.f32.mrf.mxu0
        %v1224 = vadd.f32 %v1055, %v1223
        %v1225 = vpop.f32.mrf.mxu0
        %v1226 = vadd.f32 %v1057, %v1225
        %1227 = vmatmul.bf16.gmra.mxu0 %v749
        %v1228 = vpop.f32.mrf.mxu0
        %v1229 = vadd.f32 %v1060, %v1228
        %v1230 = vpop.f32.mrf.mxu0
        %v1231 = vadd.f32 %v1062, %v1230
        %1232 = vmatmul.bf16.gmra.mxu0 %v751
        %v1233 = vpop.f32.mrf.mxu0
        %v1234 = vadd.f32 %v1065, %v1233
        %v1235 = vpop.f32.mrf.mxu0
        %v1236 = vadd.f32 %v1067, %v1235
        %1237 = vmatmul.bf16.gmra.mxu0 %v753
        %v1238 = vpop.f32.mrf.mxu0
        %v1239 = vadd.f32 %v1070, %v1238
        %v1240 = vpop.f32.mrf.mxu0
        %v1241 = vadd.f32 %v1072, %v1240
        %1242 = vmatmul.bf16.gmra.mxu0 %v755
        %v1243 = vpop.f32.mrf.mxu0
        %v1244 = vadd.f32 %v1075, %v1243
        %v1245 = vpop.f32.mrf.mxu0
        %v1246 = vadd.f32 %v1077, %v1245
        %1247 = vmatmul.bf16.gmra.mxu0 %v757
        %v1248 = vpop.f32.mrf.mxu0
        %v1249 = vadd.f32 %v1080, %v1248
        %v1250 = vpop.f32.mrf.mxu0
        %v1251 = vadd.f32 %v1082, %v1250
        %1252 = vmatmul.bf16.gmra.mxu0 %v759
        %v1253 = vpop.f32.mrf.mxu0
        %v1254 = vadd.f32 %v1085, %v1253
        %v1255 = vpop.f32.mrf.mxu0
        %v1256 = vadd.f32 %v1087, %v1255
        %1257 = vdwg.mxu0
        %v1258 = vadd.f32 %v344, %v1099
        %v1259 = vadd.f32 %v345, %v1101
        %v1260 = vadd.f32 %v346, %v1104
        %v1261 = vadd.f32 %v347, %v1106
        %v1262 = vadd.f32 %v348, %v1109
        %v1263 = vadd.f32 %v349, %v1111
        %v1264 = vadd.f32 %v350, %v1114
        %v1265 = vadd.f32 %v351, %v1116
        %v1266 = vadd.f32 %v352, %v1119
        %v1267 = vadd.f32 %v353, %v1121
        %v1268 = vadd.f32 %v354, %v1124
        %v1269 = vadd.f32 %v355, %v1126
        %v1270 = vadd.f32 %v356, %v1129
        %v1271 = vadd.f32 %v357, %v1131
        %v1272 = vadd.f32 %v358, %v1134
        %v1273 = vadd.f32 %v359, %v1136
        %v1274 = vadd.f32 %v360, %v1139
        %v1275 = vadd.f32 %v361, %v1141
        %v1276 = vadd.f32 %v362, %v1144
        %v1277 = vadd.f32 %v363, %v1146
        %v1278 = vadd.f32 %v364, %v1149
        %v1279 = vadd.f32 %v365, %v1151
        %v1280 = vadd.f32 %v366, %v1154
        %v1281 = vadd.f32 %v367, %v1156
        %v1282 = vadd.f32 %v368, %v1159
        %v1283 = vadd.f32 %v369, %v1161
        %v1284 = vadd.f32 %v370, %v1164
        %v1285 = vadd.f32 %v371, %v1166
        %v1286 = vadd.f32 %v372, %v1169
        %v1287 = vadd.f32 %v373, %v1171
        %v1288 = vadd.f32 %v374, %v1174
        %v1289 = vadd.f32 %v375, %v1176
        %v1290 = vadd.f32 %v376, %v1179
        %v1291 = vadd.f32 %v377, %v1181
        %v1292 = vadd.f32 %v378, %v1184
        %v1293 = vadd.f32 %v379, %v1186
        %v1294 = vadd.f32 %v380, %v1189
        %v1295 = vadd.f32 %v381, %v1191
        %v1296 = vadd.f32 %v382, %v1194
        %v1297 = vadd.f32 %v383, %v1196
        %v1298 = vadd.f32 %v384, %v1199
        %v1299 = vadd.f32 %v385, %v1201
        %v1300 = vadd.f32 %v386, %v1204
        %v1301 = vadd.f32 %v387, %v1206
        %v1302 = vadd.f32 %v388, %v1209
        %v1303 = vadd.f32 %v389, %v1211
        %v1304 = vadd.f32 %v390, %v1214
        %v1305 = vadd.f32 %v391, %v1216
        %v1306 = vadd.f32 %v392, %v1219
        %v1307 = vadd.f32 %v393, %v1221
        %v1308 = vadd.f32 %v394, %v1224
        %v1309 = vadd.f32 %v395, %v1226
        %v1310 = vadd.f32 %v396, %v1229
        %v1311 = vadd.f32 %v397, %v1231
        %v1312 = vadd.f32 %v398, %v1234
        %v1313 = vadd.f32 %v399, %v1236
        %v1314 = vadd.f32 %v400, %v1239
        %v1315 = vadd.f32 %v401, %v1241
        %v1316 = vadd.f32 %v402, %v1244
        %v1317 = vadd.f32 %v403, %v1246
        %v1318 = vadd.f32 %v404, %v1249
        %v1319 = vadd.f32 %v405, %v1251
        %v1320 = vadd.f32 %v406, %v1254
        %v1321 = vadd.f32 %v407, %v1256
        %vm1322 = vcmask 523264
        %1323 = vst.msk [vmem:[#allocation2] sm:$0xff] %vm1322, %v1258
        %1324 = vst.msk [vmem:[#allocation2 + $0x8] sm:$0xff] %vm1322, %v1259
        %1325 = vst.msk [vmem:[#allocation2 + $0x10] sm:$0xff] %vm1322, %v1260
        %1326 = vst.msk [vmem:[#allocation2 + $0x18] sm:$0xff] %vm1322, %v1261
        %1327 = vst.msk [vmem:[#allocation2 + $0x20] sm:$0xff] %vm1322, %v1262
        %1328 = vst.msk [vmem:[#allocation2 + $0x28] sm:$0xff] %vm1322, %v1263
        %1329 = vst.msk [vmem:[#allocation2 + $0x30] sm:$0xff] %vm1322, %v1264
        %1330 = vst.msk [vmem:[#allocation2 + $0x38] sm:$0xff] %vm1322, %v1265
        %1331 = vst.msk [vmem:[#allocation2 + $0x40] sm:$0xff] %vm1322, %v1266
        %1332 = vst.msk [vmem:[#allocation2 + $0x48] sm:$0xff] %vm1322, %v1267
        %1333 = vst.msk [vmem:[#allocation2 + $0x50] sm:$0xff] %vm1322, %v1268
        %1334 = vst.msk [vmem:[#allocation2 + $0x58] sm:$0xff] %vm1322, %v1269
        %1335 = vst.msk [vmem:[#allocation2 + $0x60] sm:$0xff] %vm1322, %v1270
        %1336 = vst.msk [vmem:[#allocation2 + $0x68] sm:$0xff] %vm1322, %v1271
        %1337 = vst.msk [vmem:[#allocation2 + $0x70] sm:$0xff] %vm1322, %v1272
        %1338 = vst.msk [vmem:[#allocation2 + $0x78] sm:$0xff] %vm1322, %v1273
        %1339 = vst.msk [vmem:[#allocation2 + $0x80] sm:$0xff] %vm1322, %v1274
        %1340 = vst.msk [vmem:[#allocation2 + $0x88] sm:$0xff] %vm1322, %v1275
        %1341 = vst.msk [vmem:[#allocation2 + $0x90] sm:$0xff] %vm1322, %v1276
        %1342 = vst.msk [vmem:[#allocation2 + $0x98] sm:$0xff] %vm1322, %v1277
        %1343 = vst.msk [vmem:[#allocation2 + $0xa0] sm:$0xff] %vm1322, %v1278
        %1344 = vst.msk [vmem:[#allocation2 + $0xa8] sm:$0xff] %vm1322, %v1279
        %1345 = vst.msk [vmem:[#allocation2 + $0xb0] sm:$0xff] %vm1322, %v1280
        %1346 = vst.msk [vmem:[#allocation2 + $0xb8] sm:$0xff] %vm1322, %v1281
        %1347 = vst.msk [vmem:[#allocation2 + $0xc0] sm:$0xff] %vm1322, %v1282
        %1348 = vst.msk [vmem:[#allocation2 + $0xc8] sm:$0xff] %vm1322, %v1283
        %1349 = vst.msk [vmem:[#allocation2 + $0xd0] sm:$0xff] %vm1322, %v1284
        %1350 = vst.msk [vmem:[#allocation2 + $0xd8] sm:$0xff] %vm1322, %v1285
        %1351 = vst.msk [vmem:[#allocation2 + $0xe0] sm:$0xff] %vm1322, %v1286
        %1352 = vst.msk [vmem:[#allocation2 + $0xe8] sm:$0xff] %vm1322, %v1287
        %1353 = vst.msk [vmem:[#allocation2 + $0xf0] sm:$0xff] %vm1322, %v1288
        %1354 = vst.msk [vmem:[#allocation2 + $0xf8] sm:$0xff] %vm1322, %v1289
        %1355 = vst.msk [vmem:[#allocation2 + $0x100] sm:$0xff] %vm1322, %v1290
        %1356 = vst.msk [vmem:[#allocation2 + $0x108] sm:$0xff] %vm1322, %v1291
        %1357 = vst.msk [vmem:[#allocation2 + $0x110] sm:$0xff] %vm1322, %v1292
        %1358 = vst.msk [vmem:[#allocation2 + $0x118] sm:$0xff] %vm1322, %v1293
        %1359 = vst.msk [vmem:[#allocation2 + $0x120] sm:$0xff] %vm1322, %v1294
        %1360 = vst.msk [vmem:[#allocation2 + $0x128] sm:$0xff] %vm1322, %v1295
        %1361 = vst.msk [vmem:[#allocation2 + $0x130] sm:$0xff] %vm1322, %v1296
        %1362 = vst.msk [vmem:[#allocation2 + $0x138] sm:$0xff] %vm1322, %v1297
        %1363 = vst.msk [vmem:[#allocation2 + $0x140] sm:$0xff] %vm1322, %v1298
        %1364 = vst.msk [vmem:[#allocation2 + $0x148] sm:$0xff] %vm1322, %v1299
        %1365 = vst.msk [vmem:[#allocation2 + $0x150] sm:$0xff] %vm1322, %v1300
        %1366 = vst.msk [vmem:[#allocation2 + $0x158] sm:$0xff] %vm1322, %v1301
        %1367 = vst.msk [vmem:[#allocation2 + $0x160] sm:$0xff] %vm1322, %v1302
        %1368 = vst.msk [vmem:[#allocation2 + $0x168] sm:$0xff] %vm1322, %v1303
        %1369 = vst.msk [vmem:[#allocation2 + $0x170] sm:$0xff] %vm1322, %v1304
        %1370 = vst.msk [vmem:[#allocation2 + $0x178] sm:$0xff] %vm1322, %v1305
        %1371 = vst.msk [vmem:[#allocation2 + $0x180] sm:$0xff] %vm1322, %v1306
        %1372 = vst.msk [vmem:[#allocation2 + $0x188] sm:$0xff] %vm1322, %v1307
        %1373 = vst.msk [vmem:[#allocation2 + $0x190] sm:$0xff] %vm1322, %v1308
        %1374 = vst.msk [vmem:[#allocation2 + $0x198] sm:$0xff] %vm1322, %v1309
        %1375 = vst.msk [vmem:[#allocation2 + $0x1a0] sm:$0xff] %vm1322, %v1310
        %1376 = vst.msk [vmem:[#allocation2 + $0x1a8] sm:$0xff] %vm1322, %v1311
        %1377 = vst.msk [vmem:[#allocation2 + $0x1b0] sm:$0xff] %vm1322, %v1312
        %1378 = vst.msk [vmem:[#allocation2 + $0x1b8] sm:$0xff] %vm1322, %v1313
        %1379 = vst.msk [vmem:[#allocation2 + $0x1c0] sm:$0xff] %vm1322, %v1314
        %1380 = vst.msk [vmem:[#allocation2 + $0x1c8] sm:$0xff] %vm1322, %v1315
        %1381 = vst.msk [vmem:[#allocation2 + $0x1d0] sm:$0xff] %vm1322, %v1316
        %1382 = vst.msk [vmem:[#allocation2 + $0x1d8] sm:$0xff] %vm1322, %v1317
        %1383 = vst.msk [vmem:[#allocation2 + $0x1e0] sm:$0xff] %vm1322, %v1318
        %1384 = vst.msk [vmem:[#allocation2 + $0x1e8] sm:$0xff] %vm1322, %v1319
        %1385 = vst.msk [vmem:[#allocation2 + $0x1f0] sm:$0xff] %vm1322, %v1320
        %1386 = vst.msk [vmem:[#allocation2 + $0x1f8] sm:$0xff] %vm1322, %v1321
        // Predicated region
        $region41: #{tpu_custom_call.1} parent=31 // pred_check
          %p1387 = pneg %p275
        $region42: #{tpu_custom_call.1} parent=31 // pred_check_branch
          %1389 = sbr.rel (%p1387) target = $region44
        $region43: #{tpu_custom_call.1} parent=31 // pred_region
          %v1390 = vld [vmem:[#allocation2] sm:$0xff]
          %v1391 = vld [vmem:[#allocation2 + $0x8] sm:$0xff]
          %v1392 = vld [vmem:[#allocation2 + $0x10] sm:$0xff]
          %v1393 = vld [vmem:[#allocation2 + $0x18] sm:$0xff]
          %v1394 = vld [vmem:[#allocation2 + $0x20] sm:$0xff]
          %v1395 = vld [vmem:[#allocation2 + $0x28] sm:$0xff]
          %v1396 = vld [vmem:[#allocation2 + $0x30] sm:$0xff]
          %v1397 = vld [vmem:[#allocation2 + $0x38] sm:$0xff]
          %v1398 = vld [vmem:[#allocation2 + $0x40] sm:$0xff]
          %v1399 = vld [vmem:[#allocation2 + $0x48] sm:$0xff]
          %v1400 = vld [vmem:[#allocation2 + $0x50] sm:$0xff]
          %v1401 = vld [vmem:[#allocation2 + $0x58] sm:$0xff]
          %v1402 = vld [vmem:[#allocation2 + $0x60] sm:$0xff]
          %v1403 = vld [vmem:[#allocation2 + $0x68] sm:$0xff]
          %v1404 = vld [vmem:[#allocation2 + $0x70] sm:$0xff]
          %v1405 = vld [vmem:[#allocation2 + $0x78] sm:$0xff]
          %v1406 = vld [vmem:[#allocation2 + $0x80] sm:$0xff]
          %v1407 = vld [vmem:[#allocation2 + $0x88] sm:$0xff]
          %v1408 = vld [vmem:[#allocation2 + $0x90] sm:$0xff]
          %v1409 = vld [vmem:[#allocation2 + $0x98] sm:$0xff]
          %v1410 = vld [vmem:[#allocation2 + $0xa0] sm:$0xff]
          %v1411 = vld [vmem:[#allocation2 + $0xa8] sm:$0xff]
          %v1412 = vld [vmem:[#allocation2 + $0xb0] sm:$0xff]
          %v1413 = vld [vmem:[#allocation2 + $0xb8] sm:$0xff]
          %v1414 = vld [vmem:[#allocation2 + $0xc0] sm:$0xff]
          %v1415 = vld [vmem:[#allocation2 + $0xc8] sm:$0xff]
          %v1416 = vld [vmem:[#allocation2 + $0xd0] sm:$0xff]
          %v1417 = vld [vmem:[#allocation2 + $0xd8] sm:$0xff]
          %v1418 = vld [vmem:[#allocation2 + $0xe0] sm:$0xff]
          %v1419 = vld [vmem:[#allocation2 + $0xe8] sm:$0xff]
          %v1420 = vld [vmem:[#allocation2 + $0xf0] sm:$0xff]
          %v1421 = vld [vmem:[#allocation2 + $0xf8] sm:$0xff]
          %v1422 = vld [vmem:[#allocation2 + $0x100] sm:$0xff]
          %v1423 = vld [vmem:[#allocation2 + $0x108] sm:$0xff]
          %v1424 = vld [vmem:[#allocation2 + $0x110] sm:$0xff]
          %v1425 = vld [vmem:[#allocation2 + $0x118] sm:$0xff]
          %v1426 = vld [vmem:[#allocation2 + $0x120] sm:$0xff]
          %v1427 = vld [vmem:[#allocation2 + $0x128] sm:$0xff]
          %v1428 = vld [vmem:[#allocation2 + $0x130] sm:$0xff]
          %v1429 = vld [vmem:[#allocation2 + $0x138] sm:$0xff]
          %v1430 = vld [vmem:[#allocation2 + $0x140] sm:$0xff]
          %v1431 = vld [vmem:[#allocation2 + $0x148] sm:$0xff]
          %v1432 = vld [vmem:[#allocation2 + $0x150] sm:$0xff]
          %v1433 = vld [vmem:[#allocation2 + $0x158] sm:$0xff]
          %v1434 = vld [vmem:[#allocation2 + $0x160] sm:$0xff]
          %v1435 = vld [vmem:[#allocation2 + $0x168] sm:$0xff]
          %v1436 = vld [vmem:[#allocation2 + $0x170] sm:$0xff]
          %v1437 = vld [vmem:[#allocation2 + $0x178] sm:$0xff]
          %v1438 = vld [vmem:[#allocation2 + $0x180] sm:$0xff]
          %v1439 = vld [vmem:[#allocation2 + $0x188] sm:$0xff]
          %v1440 = vld [vmem:[#allocation2 + $0x190] sm:$0xff]
          %v1441 = vld [vmem:[#allocation2 + $0x198] sm:$0xff]
          %v1442 = vld [vmem:[#allocation2 + $0x1a0] sm:$0xff]
          %v1443 = vld [vmem:[#allocation2 + $0x1a8] sm:$0xff]
          %v1444 = vld [vmem:[#allocation2 + $0x1b0] sm:$0xff]
          %v1445 = vld [vmem:[#allocation2 + $0x1b8] sm:$0xff]
          %v1446 = vld [vmem:[#allocation2 + $0x1c0] sm:$0xff]
          %v1447 = vld [vmem:[#allocation2 + $0x1c8] sm:$0xff]
          %v1448 = vld [vmem:[#allocation2 + $0x1d0] sm:$0xff]
          %v1449 = vld [vmem:[#allocation2 + $0x1d8] sm:$0xff]
          %v1450 = vld [vmem:[#allocation2 + $0x1e0] sm:$0xff]
          %v1451 = vld [vmem:[#allocation2 + $0x1e8] sm:$0xff]
          %v1452 = vld [vmem:[#allocation2 + $0x1f0] sm:$0xff]
          %v1453 = vld [vmem:[#allocation2 + $0x1f8] sm:$0xff]
          %v1454 = vld [vmem:[%s265] sm:$0x1]
          %v1456 = vperm.slane %v1454, 0
          %v1458 = vadd.f32 %v1390, %v1456
          %v1459 = vadd.f32 %v1391, %v1456
          %v1460 = vadd.f32 %v1392, %v1456
          %v1461 = vadd.f32 %v1393, %v1456
          %v1462 = vadd.f32 %v1394, %v1456
          %v1463 = vadd.f32 %v1395, %v1456
          %v1464 = vadd.f32 %v1396, %v1456
          %v1465 = vadd.f32 %v1397, %v1456
          %v1466 = vadd.f32 %v1398, %v1456
          %v1467 = vadd.f32 %v1399, %v1456
          %v1468 = vadd.f32 %v1400, %v1456
          %v1469 = vadd.f32 %v1401, %v1456
          %v1470 = vadd.f32 %v1402, %v1456
          %v1471 = vadd.f32 %v1403, %v1456
          %v1472 = vadd.f32 %v1404, %v1456
          %v1473 = vadd.f32 %v1405, %v1456
          %v1474 = vadd.f32 %v1406, %v1456
          %v1475 = vadd.f32 %v1407, %v1456
          %v1476 = vadd.f32 %v1408, %v1456
          %v1477 = vadd.f32 %v1409, %v1456
          %v1478 = vadd.f32 %v1410, %v1456
          %v1479 = vadd.f32 %v1411, %v1456
          %v1480 = vadd.f32 %v1412, %v1456
          %v1481 = vadd.f32 %v1413, %v1456
          %v1482 = vadd.f32 %v1414, %v1456
          %v1483 = vadd.f32 %v1415, %v1456
          %v1484 = vadd.f32 %v1416, %v1456
          %v1485 = vadd.f32 %v1417, %v1456
          %v1486 = vadd.f32 %v1418, %v1456
          %v1487 = vadd.f32 %v1419, %v1456
          %v1488 = vadd.f32 %v1420, %v1456
          %v1489 = vadd.f32 %v1421, %v1456
          %v1490 = vadd.f32 %v1422, %v1456
          %v1491 = vadd.f32 %v1423, %v1456
          %v1492 = vadd.f32 %v1424, %v1456
          %v1493 = vadd.f32 %v1425, %v1456
          %v1494 = vadd.f32 %v1426, %v1456
          %v1495 = vadd.f32 %v1427, %v1456
          %v1496 = vadd.f32 %v1428, %v1456
          %v1497 = vadd.f32 %v1429, %v1456
          %v1498 = vadd.f32 %v1430, %v1456
          %v1499 = vadd.f32 %v1431, %v1456
          %v1500 = vadd.f32 %v1432, %v1456
          %v1501 = vadd.f32 %v1433, %v1456
          %v1502 = vadd.f32 %v1434, %v1456
          %v1503 = vadd.f32 %v1435, %v1456
          %v1504 = vadd.f32 %v1436, %v1456
          %v1505 = vadd.f32 %v1437, %v1456
          %v1506 = vadd.f32 %v1438, %v1456
          %v1507 = vadd.f32 %v1439, %v1456
          %v1508 = vadd.f32 %v1440, %v1456
          %v1509 = vadd.f32 %v1441, %v1456
          %v1510 = vadd.f32 %v1442, %v1456
          %v1511 = vadd.f32 %v1443, %v1456
          %v1512 = vadd.f32 %v1444, %v1456
          %v1513 = vadd.f32 %v1445, %v1456
          %v1514 = vadd.f32 %v1446, %v1456
          %v1515 = vadd.f32 %v1447, %v1456
          %v1516 = vadd.f32 %v1448, %v1456
          %v1517 = vadd.f32 %v1449, %v1456
          %v1518 = vadd.f32 %v1450, %v1456
          %v1519 = vadd.f32 %v1451, %v1456
          %v1520 = vadd.f32 %v1452, %v1456
          %v1521 = vadd.f32 %v1453, %v1456
          %v1522 = vmax.f32 %v1458, 0.0
          %v1523 = vmax.f32 %v1459, 0.0
          %v1524 = vmax.f32 %v1460, 0.0
          %v1525 = vmax.f32 %v1461, 0.0
          %v1526 = vmax.f32 %v1462, 0.0
          %v1527 = vmax.f32 %v1463, 0.0
          %v1528 = vmax.f32 %v1464, 0.0
          %v1529 = vmax.f32 %v1465, 0.0
          %v1530 = vmax.f32 %v1466, 0.0
          %v1531 = vmax.f32 %v1467, 0.0
          %v1532 = vmax.f32 %v1468, 0.0
          %v1533 = vmax.f32 %v1469, 0.0
          %v1534 = vmax.f32 %v1470, 0.0
          %v1535 = vmax.f32 %v1471, 0.0
          %v1536 = vmax.f32 %v1472, 0.0
          %v1537 = vmax.f32 %v1473, 0.0
          %v1538 = vmax.f32 %v1474, 0.0
          %v1539 = vmax.f32 %v1475, 0.0
          %v1540 = vmax.f32 %v1476, 0.0
          %v1541 = vmax.f32 %v1477, 0.0
          %v1542 = vmax.f32 %v1478, 0.0
          %v1543 = vmax.f32 %v1479, 0.0
          %v1544 = vmax.f32 %v1480, 0.0
          %v1545 = vmax.f32 %v1481, 0.0
          %v1546 = vmax.f32 %v1482, 0.0
          %v1547 = vmax.f32 %v1483, 0.0
          %v1548 = vmax.f32 %v1484, 0.0
          %v1549 = vmax.f32 %v1485, 0.0
          %v1550 = vmax.f32 %v1486, 0.0
          %v1551 = vmax.f32 %v1487, 0.0
          %v1552 = vmax.f32 %v1488, 0.0
          %v1553 = vmax.f32 %v1489, 0.0
          %v1554 = vmax.f32 %v1490, 0.0
          %v1555 = vmax.f32 %v1491, 0.0
          %v1556 = vmax.f32 %v1492, 0.0
          %v1557 = vmax.f32 %v1493, 0.0
          %v1558 = vmax.f32 %v1494, 0.0
          %v1559 = vmax.f32 %v1495, 0.0
          %v1560 = vmax.f32 %v1496, 0.0
          %v1561 = vmax.f32 %v1497, 0.0
          %v1562 = vmax.f32 %v1498, 0.0
          %v1563 = vmax.f32 %v1499, 0.0
          %v1564 = vmax.f32 %v1500, 0.0
          %v1565 = vmax.f32 %v1501, 0.0
          %v1566 = vmax.f32 %v1502, 0.0
          %v1567 = vmax.f32 %v1503, 0.0
          %v1568 = vmax.f32 %v1504, 0.0
          %v1569 = vmax.f32 %v1505, 0.0
          %v1570 = vmax.f32 %v1506, 0.0
          %v1571 = vmax.f32 %v1507, 0.0
          %v1572 = vmax.f32 %v1508, 0.0
          %v1573 = vmax.f32 %v1509, 0.0
          %v1574 = vmax.f32 %v1510, 0.0
          %v1575 = vmax.f32 %v1511, 0.0
          %v1576 = vmax.f32 %v1512, 0.0
          %v1577 = vmax.f32 %v1513, 0.0
          %v1578 = vmax.f32 %v1514, 0.0
          %v1579 = vmax.f32 %v1515, 0.0
          %v1580 = vmax.f32 %v1516, 0.0
          %v1581 = vmax.f32 %v1517, 0.0
          %v1582 = vmax.f32 %v1518, 0.0
          %v1583 = vmax.f32 %v1519, 0.0
          %v1584 = vmax.f32 %v1520, 0.0
          %v1585 = vmax.f32 %v1521, 0.0
          %v1586 = vpack.c.bf16 %v1522, %v1522
          %v1587 = vpack.c.bf16 %v1523, %v1523
          %v1588 = vpack.c.bf16 %v1524, %v1524
          %v1589 = vpack.c.bf16 %v1525, %v1525
          %v1590 = vpack.c.bf16 %v1526, %v1526
          %v1591 = vpack.c.bf16 %v1527, %v1527
          %v1592 = vpack.c.bf16 %v1528, %v1528
          %v1593 = vpack.c.bf16 %v1529, %v1529
          %v1594 = vpack.c.bf16 %v1530, %v1530
          %v1595 = vpack.c.bf16 %v1531, %v1531
          %v1596 = vpack.c.bf16 %v1532, %v1532
          %v1597 = vpack.c.bf16 %v1533, %v1533
          %v1598 = vpack.c.bf16 %v1534, %v1534
          %v1599 = vpack.c.bf16 %v1535, %v1535
          %v1600 = vpack.c.bf16 %v1536, %v1536
          %v1601 = vpack.c.bf16 %v1537, %v1537
          %v1602 = vpack.c.bf16 %v1538, %v1538
          %v1603 = vpack.c.bf16 %v1539, %v1539
          %v1604 = vpack.c.bf16 %v1540, %v1540
          %v1605 = vpack.c.bf16 %v1541, %v1541
          %v1606 = vpack.c.bf16 %v1542, %v1542
          %v1607 = vpack.c.bf16 %v1543, %v1543
          %v1608 = vpack.c.bf16 %v1544, %v1544
          %v1609 = vpack.c.bf16 %v1545, %v1545
          %v1610 = vpack.c.bf16 %v1546, %v1546
          %v1611 = vpack.c.bf16 %v1547, %v1547
          %v1612 = vpack.c.bf16 %v1548, %v1548
          %v1613 = vpack.c.bf16 %v1549, %v1549
          %v1614 = vpack.c.bf16 %v1550, %v1550
          %v1615 = vpack.c.bf16 %v1551, %v1551
          %v1616 = vpack.c.bf16 %v1552, %v1552
          %v1617 = vpack.c.bf16 %v1553, %v1553
          %v1618 = vpack.c.bf16 %v1554, %v1554
          %v1619 = vpack.c.bf16 %v1555, %v1555
          %v1620 = vpack.c.bf16 %v1556, %v1556
          %v1621 = vpack.c.bf16 %v1557, %v1557
          %v1622 = vpack.c.bf16 %v1558, %v1558
          %v1623 = vpack.c.bf16 %v1559, %v1559
          %v1624 = vpack.c.bf16 %v1560, %v1560
          %v1625 = vpack.c.bf16 %v1561, %v1561
          %v1626 = vpack.c.bf16 %v1562, %v1562
          %v1627 = vpack.c.bf16 %v1563, %v1563
          %v1628 = vpack.c.bf16 %v1564, %v1564
          %v1629 = vpack.c.bf16 %v1565, %v1565
          %v1630 = vpack.c.bf16 %v1566, %v1566
          %v1631 = vpack.c.bf16 %v1567, %v1567
          %v1632 = vpack.c.bf16 %v1568, %v1568
          %v1633 = vpack.c.bf16 %v1569, %v1569
          %v1634 = vpack.c.bf16 %v1570, %v1570
          %v1635 = vpack.c.bf16 %v1571, %v1571
          %v1636 = vpack.c.bf16 %v1572, %v1572
          %v1637 = vpack.c.bf16 %v1573, %v1573
          %v1638 = vpack.c.bf16 %v1574, %v1574
          %v1639 = vpack.c.bf16 %v1575, %v1575
          %v1640 = vpack.c.bf16 %v1576, %v1576
          %v1641 = vpack.c.bf16 %v1577, %v1577
          %v1642 = vpack.c.bf16 %v1578, %v1578
          %v1643 = vpack.c.bf16 %v1579, %v1579
          %v1644 = vpack.c.bf16 %v1580, %v1580
          %v1645 = vpack.c.bf16 %v1581, %v1581
          %v1646 = vpack.c.bf16 %v1582, %v1582
          %v1647 = vpack.c.bf16 %v1583, %v1583
          %v1648 = vpack.c.bf16 %v1584, %v1584
          %v1649 = vpack.c.bf16 %v1585, %v1585
          %vm1650 = vcmask 519168
          %1651 = vst.msk [vmem:[%s273] sm:$0xf] %vm1650, %v1586
          %1652 = vst.msk [vmem:[%s273 + $0x4] sm:$0xf] %vm1650, %v1587
          %1653 = vst.msk [vmem:[%s273 + $0x8] sm:$0xf] %vm1650, %v1588
          %1654 = vst.msk [vmem:[%s273 + $0xc] sm:$0xf] %vm1650, %v1589
          %1655 = vst.msk [vmem:[%s273 + $0x10] sm:$0xf] %vm1650, %v1590
          %1656 = vst.msk [vmem:[%s273 + $0x14] sm:$0xf] %vm1650, %v1591
          %1657 = vst.msk [vmem:[%s273 + $0x18] sm:$0xf] %vm1650, %v1592
          %1658 = vst.msk [vmem:[%s273 + $0x1c] sm:$0xf] %vm1650, %v1593
          %1659 = vst.msk [vmem:[%s273 + $0x20] sm:$0xf] %vm1650, %v1594
          %1660 = vst.msk [vmem:[%s273 + $0x24] sm:$0xf] %vm1650, %v1595
          %1661 = vst.msk [vmem:[%s273 + $0x28] sm:$0xf] %vm1650, %v1596
          %1662 = vst.msk [vmem:[%s273 + $0x2c] sm:$0xf] %vm1650, %v1597
          %1663 = vst.msk [vmem:[%s273 + $0x30] sm:$0xf] %vm1650, %v1598
          %1664 = vst.msk [vmem:[%s273 + $0x34] sm:$0xf] %vm1650, %v1599
          %1665 = vst.msk [vmem:[%s273 + $0x38] sm:$0xf] %vm1650, %v1600
          %1666 = vst.msk [vmem:[%s273 + $0x3c] sm:$0xf] %vm1650, %v1601
          %1667 = vst.msk [vmem:[%s273 + $0x40] sm:$0xf] %vm1650, %v1602
          %1668 = vst.msk [vmem:[%s273 + $0x44] sm:$0xf] %vm1650, %v1603
          %1669 = vst.msk [vmem:[%s273 + $0x48] sm:$0xf] %vm1650, %v1604
          %1670 = vst.msk [vmem:[%s273 + $0x4c] sm:$0xf] %vm1650, %v1605
          %1671 = vst.msk [vmem:[%s273 + $0x50] sm:$0xf] %vm1650, %v1606
          %1672 = vst.msk [vmem:[%s273 + $0x54] sm:$0xf] %vm1650, %v1607
          %1673 = vst.msk [vmem:[%s273 + $0x58] sm:$0xf] %vm1650, %v1608
          %1674 = vst.msk [vmem:[%s273 + $0x5c] sm:$0xf] %vm1650, %v1609
          %1675 = vst.msk [vmem:[%s273 + $0x60] sm:$0xf] %vm1650, %v1610
          %1676 = vst.msk [vmem:[%s273 + $0x64] sm:$0xf] %vm1650, %v1611
          %1677 = vst.msk [vmem:[%s273 + $0x68] sm:$0xf] %vm1650, %v1612
          %1678 = vst.msk [vmem:[%s273 + $0x6c] sm:$0xf] %vm1650, %v1613
          %1679 = vst.msk [vmem:[%s273 + $0x70] sm:$0xf] %vm1650, %v1614
          %1680 = vst.msk [vmem:[%s273 + $0x74] sm:$0xf] %vm1650, %v1615
          %1681 = vst.msk [vmem:[%s273 + $0x78] sm:$0xf] %vm1650, %v1616
          %1682 = vst.msk [vmem:[%s273 + $0x7c] sm:$0xf] %vm1650, %v1617
          %1683 = vst.msk [vmem:[%s273 + $0x80] sm:$0xf] %vm1650, %v1618
          %1684 = vst.msk [vmem:[%s273 + $0x84] sm:$0xf] %vm1650, %v1619
          %1685 = vst.msk [vmem:[%s273 + $0x88] sm:$0xf] %vm1650, %v1620
          %1686 = vst.msk [vmem:[%s273 + $0x8c] sm:$0xf] %vm1650, %v1621
          %1687 = vst.msk [vmem:[%s273 + $0x90] sm:$0xf] %vm1650, %v1622
          %1688 = vst.msk [vmem:[%s273 + $0x94] sm:$0xf] %vm1650, %v1623
          %1689 = vst.msk [vmem:[%s273 + $0x98] sm:$0xf] %vm1650, %v1624
          %1690 = vst.msk [vmem:[%s273 + $0x9c] sm:$0xf] %vm1650, %v1625
          %1691 = vst.msk [vmem:[%s273 + $0xa0] sm:$0xf] %vm1650, %v1626
          %1692 = vst.msk [vmem:[%s273 + $0xa4] sm:$0xf] %vm1650, %v1627
          %1693 = vst.msk [vmem:[%s273 + $0xa8] sm:$0xf] %vm1650, %v1628
          %1694 = vst.msk [vmem:[%s273 + $0xac] sm:$0xf] %vm1650, %v1629
          %1695 = vst.msk [vmem:[%s273 + $0xb0] sm:$0xf] %vm1650, %v1630
          %1696 = vst.msk [vmem:[%s273 + $0xb4] sm:$0xf] %vm1650, %v1631
          %1697 = vst.msk [vmem:[%s273 + $0xb8] sm:$0xf] %vm1650, %v1632
          %1698 = vst.msk [vmem:[%s273 + $0xbc] sm:$0xf] %vm1650, %v1633
          %1699 = vst.msk [vmem:[%s273 + $0xc0] sm:$0xf] %vm1650, %v1634
          %1700 = vst.msk [vmem:[%s273 + $0xc4] sm:$0xf] %vm1650, %v1635
          %1701 = vst.msk [vmem:[%s273 + $0xc8] sm:$0xf] %vm1650, %v1636
          %1702 = vst.msk [vmem:[%s273 + $0xcc] sm:$0xf] %vm1650, %v1637
          %1703 = vst.msk [vmem:[%s273 + $0xd0] sm:$0xf] %vm1650, %v1638
          %1704 = vst.msk [vmem:[%s273 + $0xd4] sm:$0xf] %vm1650, %v1639
          %1705 = vst.msk [vmem:[%s273 + $0xd8] sm:$0xf] %vm1650, %v1640
          %1706 = vst.msk [vmem:[%s273 + $0xdc] sm:$0xf] %vm1650, %v1641
          %1707 = vst.msk [vmem:[%s273 + $0xe0] sm:$0xf] %vm1650, %v1642
          %1708 = vst.msk [vmem:[%s273 + $0xe4] sm:$0xf] %vm1650, %v1643
          %1709 = vst.msk [vmem:[%s273 + $0xe8] sm:$0xf] %vm1650, %v1644
          %1710 = vst.msk [vmem:[%s273 + $0xec] sm:$0xf] %vm1650, %v1645
          %1711 = vst.msk [vmem:[%s273 + $0xf0] sm:$0xf] %vm1650, %v1646
          %1712 = vst.msk [vmem:[%s273 + $0xf4] sm:$0xf] %vm1650, %v1647
          %1713 = vst.msk [vmem:[%s273 + $0xf8] sm:$0xf] %vm1650, %v1648
          %1714 = vst.msk [vmem:[%s273 + $0xfc] sm:$0xf] %vm1650, %v1649
        $region44: #{tpu_custom_call.1} parent=31 // pred_fallthru
          _
        %s1715 = smul.u32 64, %s22
        %p1716 = scmp.lt.s32.totalorder %s1715, 255
        %s1717 = scalar_select %p1716, %s1715, 255
        %p1718 = scmp.lt.s32.totalorder %s23, 0
        %s1719 = scalar_select %p1718, %s23, 0
        %s1720 = sadd.s32 %s1719, %s1717
        %s1721 = smul.addr %s1720, 4
        %s1722 = scalar_lea.vmem %s3, %s1721
        // Predicated region
        $region45: #{tpu_custom_call.1} parent=31 // pred_check
          %p1723 = pneg %p138
        $region46: #{tpu_custom_call.1} parent=31 // pred_check_branch
          %1725 = sbr.rel (%p1723) target = $region48
        $region47: #{tpu_custom_call.1} parent=31 // pred_region
          %s1726 = smul.u32 64, %s22
        $region48: #{tpu_custom_call.1} parent=31 // pred_fallthru
          _
      $region32: #{tpu_custom_call.1} parent=5 // pred_fallthru
        _
      %p1727 = scmp.le.s32.totalorder 2, %s12
      // Predicated region
      $region49: #{tpu_custom_call.1} parent=5 // pred_check
        %p1728 = pneg %p1727
      $region50: #{tpu_custom_call.1} parent=5 // pred_check_branch
        %1730 = sbr.rel (%p1728) target = $region52
      $region51: #{tpu_custom_call.1} parent=5 // pred_region
        %s1731 = ssub.s32 %s12, 2
        // Predicated region
        $region53: #{tpu_custom_call.1} parent=51 // pred_check
          %p1732 = pneg %p144
        $region54: #{tpu_custom_call.1} parent=51 // pred_check_branch
          %1734 = sbr.rel (%p1732) target = $region56
        $region55: #{tpu_custom_call.1} parent=51 // pred_region
          %s1735 = smul.u32 64, %s25
          %p1736 = scmp.lt.s32.totalorder %s1735, 255
          %s1737 = scalar_select %p1736, %s1735, 255
          %p1738 = scmp.lt.s32.totalorder %s26, 0
          %s1739 = scalar_select %p1738, %s26, 0
          %s1740 = sadd.s32 %s1739, %s1737
          %s1741 = smul.addr %s1740, 4
          %s1742 = scalar_lea.vmem %s3, %s1741
        $region56: #{tpu_custom_call.1} parent=51 // pred_fallthru
          _
      $region52: #{tpu_custom_call.1} parent=5 // pred_fallthru
        _
    $region6: #{tpu_custom_call.1} parent=1 // loop_footer
      %s16 = sadd.s32 1, %s12
    $region7: #{tpu_custom_call.1} parent=1 // loop_footer_branch
      %11 = sbr.rel target = $region3
    $region8: #{tpu_custom_call.1} parent=1 // loop_exit
      _
    %1743 = vsyncpa [#allocation4], 1
    %s1744 = scalar_lea.sflag [#allocation4], 1
    %1745 = vsyncpa %s1744, 1

</llo_original>
